<compile_context>
chip_gen: v7x
topology: tpu7x:2x2x1
jax: 0.10.0
libtpu: 0.0.40
codegen_flags: <defaults>
</compile_context>

<pallas_src>
import functools

import jax
import jax.numpy as jnp
from jax.experimental import pallas as pl
from jax.experimental.pallas import tpu as pltpu


# ----------------------------------------------------------------------------
# Kernel 1: CNN news encoder, batched over BLK items per grid step.
#   conv1d(k=3, pad=1) as a single K=3*De matmul + ReLU + masked attention pool.
# ----------------------------------------------------------------------------
def _news_encoder_kernel(x_ref, bias_ref, w_ref, b_ref, wa_ref, va_ref, o_ref):
    BLK, T, K = x_ref.shape                     # x: [BLK, T, 3*De] bf16 (im2col)

    x = x_ref[...].reshape(BLK * T, K)                                   # bf16
    h = jnp.dot(x, w_ref[...], preferred_element_type=jnp.float32)      # [BLK*T, F]
    h = jnp.maximum(h + b_ref[...], 0.0)                                 # f32
    F = h.shape[-1]

    # additive attention: tanh(h @ Wa) . va  (va as a row -> VPU lane reduce)
    a = jnp.tanh(jnp.dot(h.astype(jnp.bfloat16), wa_ref[...],
                         preferred_element_type=jnp.float32))            # [BLK*T, Fa]
    s = jnp.sum(a * va_ref[...], axis=-1, keepdims=True)                 # [BLK*T, 1]

    # masked softmax over words (additive bias, precomputed in wrapper)
    s2 = s.reshape(BLK, T) + bias_ref[...]                               # [BLK, T]
    s2 = s2 - jnp.max(s2, axis=-1, keepdims=True)
    e = jnp.exp(s2)
    wgt = e * pl.reciprocal(jnp.sum(e, axis=-1, keepdims=True), approx=True)

    h3 = h.reshape(BLK, T, F)
    pooled = jnp.sum(h3 * wgt[:, :, None], axis=1)                       # [BLK, F]
    o_ref[...] = pooled.astype(o_ref.dtype)                              # bf16 out


def encode_news(title_text, title_mask, params, blk=64):
    """title_text: [items, T] int32, title_mask: [items, T] -> [items, F] bf16."""
    items, T = title_text.shape
    De = params["emb"].shape[1]
    F = params["cnn_w"].shape[1]
    Fa = params["att_w"].shape[1]

    # glue: embedding gather + k=3 im2col concat (one fat K=3*De matmul in-kernel)
    emb = params["emb"][title_text].astype(jnp.bfloat16)                 # [items, T, De]
    embp = jnp.pad(emb, ((0, 0), (1, 1), (0, 0)))                        # [items, T+2, De]
    x_cat = jnp.concatenate(
        [embp[:, 0:T, :], embp[:, 1:T + 1, :], embp[:, 2:T + 2, :]], axis=-1
    )                                                                    # [items, T, 3*De]
    # word mask -> additive bias (0 / -1e9), no lane-sparse mask block
    bias = jnp.where(title_mask > 0.0, 0.0, -1e9).astype(jnp.float32)    # [items, T]

    # adapt blk for tiny inputs: keep >=2 grid steps (v7x megacore) / limit padding
    half = (((items + 1) // 2) + 7) // 8 * 8
    blk = max(8, min(blk, half))
    items_pad = pl.cdiv(items, blk) * blk
    if items_pad != items:
        x_cat = jnp.pad(x_cat, ((0, items_pad - items), (0, 0), (0, 0)))
        bias = jnp.pad(bias, ((0, items_pad - items), (0, 0)))

    cnn_w = params["cnn_w"].astype(jnp.bfloat16)                         # [3*De, F]
    att_w = params["att_w"].astype(jnp.bfloat16)                         # [F, Fa]
    cnn_b = params["cnn_b"]                                              # [1, F]   f32
    att_v = params["att_v"]                                              # [1, Fa]  f32

    out = pl.pallas_call(
        _news_encoder_kernel,
        out_shape=jax.ShapeDtypeStruct((items_pad, F), jnp.bfloat16),
        grid=(items_pad // blk,),
        in_specs=[
            pl.BlockSpec((blk, T, 3 * De), lambda i: (i, 0, 0)),
            pl.BlockSpec((blk, T), lambda i: (i, 0)),
            pl.BlockSpec((3 * De, F), lambda i: (0, 0)),
            pl.BlockSpec((1, F), lambda i: (0, 0)),
            pl.BlockSpec((F, Fa), lambda i: (0, 0)),
            pl.BlockSpec((1, Fa), lambda i: (0, 0)),
        ],
        out_specs=pl.BlockSpec((blk, F), lambda i: (i, 0)),
        compiler_params=pltpu.CompilerParams(dimension_semantics=("parallel",)),
    )(x_cat, bias, cnn_w, cnn_b, att_w, att_v)
    return out[:items]


# ----------------------------------------------------------------------------
# Kernel 2: graph encoder + fused logits, BLK_B batch elements per grid step.
# ----------------------------------------------------------------------------
def _graph_logits_kernel(cand_ref, gbias_ref, uemb_ref, wq_ref, wk_ref, o_ref):
    BN, G, F = cand_ref.shape           # BN = BLK_B * N
    BB, H, _ = uemb_ref.shape           # BB = BLK_B
    N = BN // BB

    h = cand_ref[...]                   # [BN, G, F] bf16 news-graph node embeddings
    gbias = gbias_ref[...]              # [BN, G, G] f32 additive adjacency/mask bias
    u = uemb_ref[...]                   # [BB, H, F] bf16 user history news embeddings

    scale = 1.0 / (float(F) ** 0.5)

    # masked graph self-attention, one hop (stacked q/k projection, bf16 MXU)
    hf = h.reshape(BN * G, F)
    q = jnp.dot(hf, wq_ref[...], preferred_element_type=jnp.float32)
    k = jnp.dot(hf, wk_ref[...], preferred_element_type=jnp.float32)
    q = q.reshape(BN, G, F).astype(jnp.bfloat16)
    k = k.reshape(BN, G, F).astype(jnp.bfloat16)
    s = jnp.einsum('ngf,nhf->ngh', q, k,
                   preferred_element_type=jnp.float32) * scale + gbias   # [BN, G, G]
    s = s - jnp.max(s, axis=-1, keepdims=True)
    e = jnp.exp(s)
    attn = e * pl.reciprocal(jnp.sum(e, axis=-1, keepdims=True), approx=True)
    h2 = jnp.einsum('ngh,nhf->ngf', attn.astype(jnp.bfloat16), h,
                    preferred_element_type=jnp.float32)                  # [BN, G, F]
    news_rep = h2[:, 0, :]                                               # [BN, F] node 0
    nr = news_rep.reshape(BB, N, F)

    # candidate-aware attention over user history
    # TODO(synk): no history-padding mask (matches the simplified reference path).
    us = jnp.einsum('bnf,bhf->bnh', nr.astype(jnp.bfloat16), u,
                    preferred_element_type=jnp.float32)                  # [BB, N, H]
    us = us - jnp.max(us, axis=-1, keepdims=True)
    ue = jnp.exp(us)
    uw = ue * pl.reciprocal(jnp.sum(ue, axis=-1, keepdims=True), approx=True)
    user_rep = jnp.einsum('bnh,bhf->bnf', uw.astype(jnp.bfloat16), u,
                          preferred_element_type=jnp.float32)            # [BB, N, F]

    # fused logits = (user_rep * news_rep).sum(-1)
    o_ref[...] = jnp.sum(user_rep * nr, axis=-1)[None]                   # [1, BB, N]


def graph_encode_logits(cand, graph_bias, user_news, params, blk_b=None):
    """cand: [bn, G, F] bf16, graph_bias: [bn, G, G] f32,
    user_news: [B, H, F] bf16 (shared across the N candidates of a batch element)."""
    bn, G, F = cand.shape
    B, H, _ = user_news.shape
    N = bn // B

    if blk_b is None:
        # batch enough rows per step for the MXU (target M ~ 256) while keeping
        # >=2 parallel grid steps when possible (v7x megacore)
        blk_b = max(1, min(max(1, B // 2), max(1, 256 // (N * G))))
    while B % blk_b != 0:
        blk_b -= 1
    grid_b = B // blk_b

    wq = params["gq_w"].astype(jnp.bfloat16)
    wk = params["gk_w"].astype(jnp.bfloat16)

    logits = pl.pallas_call(
        _graph_logits_kernel,
        out_shape=jax.ShapeDtypeStruct((grid_b, blk_b, N), jnp.float32),
        grid=(grid_b,),
        in_specs=[
            pl.BlockSpec((blk_b * N, G, F), lambda b: (b, 0, 0)),
            pl.BlockSpec((blk_b * N, G, G), lambda b: (b, 0, 0)),
            pl.BlockSpec((blk_b, H, F), lambda b: (b, 0, 0)),   # no N-fold broadcast in HBM
            pl.BlockSpec((F, F), lambda b: (0, 0)),
            pl.BlockSpec((F, F), lambda b: (0, 0)),
        ],
        out_specs=pl.BlockSpec((1, blk_b, N), lambda b: (b, 0, 0)),
        compiler_params=pltpu.CompilerParams(dimension_semantics=("parallel",)),
    )(cand, graph_bias, user_news, wq, wk)
    return logits.reshape(B, N)


# ----------------------------------------------------------------------------
# Full Model.forward
# ----------------------------------------------------------------------------
def model_forward(params, user_title_text, user_title_mask, user_graph,
                  user_category_mask, user_category_indices,
                  news_title_text, news_title_mask, news_graph, news_graph_mask):
    B, N, G, T = news_title_text.shape
    H = user_title_text.shape[1]
    bn = B * N
    F = params["cnn_w"].shape[1]

    # single merged news-encoder call: candidate-graph titles + user history titles
    tokens = jnp.concatenate([news_title_text.reshape(bn * G, T),
                              user_title_text.reshape(B * H, T)], axis=0)
    masks = jnp.concatenate([news_title_mask.reshape(bn * G, T).astype(jnp.float32),
                             user_title_mask.reshape(B * H, T).astype(jnp.float32)],
                            axis=0)
    enc = encode_news(tokens, masks, params)                 # [bn*G + B*H, F] bf16
    cand = enc[:bn * G].reshape(bn, G, F)                    # [bn, G, F] bf16
    user_news = enc[bn * G:].reshape(B, H, F)                # [B, H, F]  bf16

    # adjacency + node-validity mask folded into one additive bias (0 / -1e9)
    ng = news_graph.reshape(bn, G, G)
    ngm = news_graph_mask.reshape(bn, 1, G)
    graph_bias = jnp.where((ng > 0.0) & (ngm > 0.0), 0.0, -1e9).astype(jnp.float32)

    # TODO(synk): user_graph / user_category_mask / user_category_indices are part of
    # DIGAT's user-graph aggregation and are not consumed by this simplified encoder.
    logits = graph_encode_logits(cand, graph_bias, user_news, params)
    return logits                                            # [B, N]


# ----------------------------------------------------------------------------
# Deterministic parameter / input construction
# ----------------------------------------------------------------------------
def make_params(key, vocab=50, De=32, F=128, Fa=64):
    ks = jax.random.split(key, 7)
    return {
        "emb":   0.1 * jax.random.normal(ks[0], (vocab, De), jnp.float32),
        "cnn_w": 0.1 * jax.random.normal(ks[1], (3 * De, F), jnp.float32),
        "cnn_b": 0.1 * jax.random.normal(ks[2], (1, F), jnp.float32),
        "att_w": 0.1 * jax.random.normal(ks[3], (F, Fa), jnp.float32),
        "att_v": 0.1 * jax.random.normal(ks[4], (1, Fa), jnp.float32),
        "gq_w":  0.1 * jax.random.normal(ks[5], (F, F), jnp.float32),
        "gk_w":  0.1 * jax.random.normal(ks[6], (F, F), jnp.float32),
    }


if __name__ == "__main__":
    # small shapes consistent with the forward pass
    B, N, G, T, H, C = 2, 2, 4, 8, 4, 3        # batch, news_num, graph_size, title_len,
    UG = H + C                                 # history, category_num; user_graph_size
    V = 50

    key = jax.random.PRNGKey(0)
    kp, k1, k2, k3, k4, k5 = jax.random.split(key, 6)
    params = make_params(kp)

    user_title_text = jax.random.randint(k1, (B, H, T), 0, V, jnp.int32)
    user_title_mask = (jax.random.uniform(k2, (B, H, T)) > 0.3).astype(jnp.float32)
    user_title_mask = user_title_mask.at[..., 0].set(1.0)

    news_title_text = jax.random.randint(k3, (B, N, G, T), 0, V, jnp.int32)
    news_title_mask = (jax.random.uniform(k4, (B, N, G, T)) > 0.3).astype(jnp.float32)
    news_title_mask = news_title_mask.at[..., 0].set(1.0)

    adj = (jax.random.uniform(k5, (B, N, G, G)) > 0.5).astype(jnp.float32)
    eye = jnp.eye(G, dtype=jnp.float32)
    news_graph = jnp.maximum(adj, eye)                      # ensure self-loops
    news_graph_mask = jnp.ones((B, N, G), jnp.float32)

    user_graph = jnp.maximum(
        (jax.random.uniform(jax.random.PRNGKey(7), (B, UG, UG)) > 0.5).astype(jnp.float32),
        jnp.eye(UG, dtype=jnp.float32))
    user_category_mask = jnp.ones((B, C + 1), jnp.float32)
    user_category_indices = jax.random.randint(jax.random.PRNGKey(8), (B, H), 0, C, jnp.int32)

    fwd = jax.jit(functools.partial(model_forward, params))
    logits = fwd(user_title_text, user_title_mask, user_graph,
                 user_category_mask, user_category_indices,
                 news_title_text, news_title_mask, news_graph, news_graph_mask)
    jax.block_until_ready(logits)
    assert logits.shape == (B, N), logits.shape
    assert bool(jnp.all(jnp.isfinite(logits)))
    print("KERNEL_OK")
</pallas_src>

<mosaic_0001>
module attributes {stable_mosaic.version = 11 : i64} {
  func.func @_news_encoder_kernel(%arg0: i32, %arg1: memref<16x8x96xbf16, #tpu.memory_space<vmem>>, %arg2: memref<16x8xf32, #tpu.memory_space<vmem>>, %arg3: memref<96x128xbf16, #tpu.memory_space<vmem>>, %arg4: memref<1x128xf32, #tpu.memory_space<vmem>>, %arg5: memref<128x64xbf16, #tpu.memory_space<vmem>>, %arg6: memref<1x64xf32, #tpu.memory_space<vmem>>, %arg7: memref<16x128xbf16, #tpu.memory_space<vmem>>) attributes {dimension_semantics = [#tpu.dimension_semantics<parallel>], iteration_bounds = array<i64: 2>, scalar_prefetch = 0 : i64, scratch_operands = 0 : i64, tpu.core_type = #tpu.core_type<tc>, window_params = [{transform_indices = @transform_0, window_bounds = array<i64: 16, 8, 96>}, {transform_indices = @transform_1, window_bounds = array<i64: 16, 8>}, {pipeline_mode = #tpu.pipeline_mode<synchronous>, transform_indices = @transform_2, window_bounds = array<i64: 96, 128>}, {pipeline_mode = #tpu.pipeline_mode<synchronous>, transform_indices = @transform_3, window_bounds = array<i64: 1, 128>}, {pipeline_mode = #tpu.pipeline_mode<synchronous>, transform_indices = @transform_4, window_bounds = array<i64: 128, 64>}, {pipeline_mode = #tpu.pipeline_mode<synchronous>, transform_indices = @transform_5, window_bounds = array<i64: 1, 64>}, {transform_indices = @transform_6, window_bounds = array<i64: 16, 128>}]} {
    %c0 = arith.constant 0 : index
    %c0_0 = arith.constant 0 : index
    %c0_1 = arith.constant 0 : index
    %0 = vector.load %arg1[%c0, %c0_0, %c0_1] : memref<16x8x96xbf16, #tpu.memory_space<vmem>>, vector<16x8x96xbf16>
    %1 = vector.shape_cast %0 : vector<16x8x96xbf16> to vector<128x96xbf16>
    %c0_2 = arith.constant 0 : index
    %c0_3 = arith.constant 0 : index
    %2 = vector.load %arg3[%c0_2, %c0_3] : memref<96x128xbf16, #tpu.memory_space<vmem>>, vector<96x128xbf16>
    %cst = arith.constant dense<0.000000e+00> : vector<128x128xf32>
    %3 = tpu.matmul %1, %2, %cst {dimension_numbers = #tpu.dot_dimension_numbers<[1], [0], [0], [1], [0, 0, 1, 1], [], []>} : vector<128x96xbf16>, vector<96x128xbf16>, vector<128x128xf32> -> vector<128x128xf32>
    %c0_4 = arith.constant 0 : index
    %c0_5 = arith.constant 0 : index
    %4 = vector.load %arg4[%c0_4, %c0_5] : memref<1x128xf32, #tpu.memory_space<vmem>>, vector<1x128xf32>
    %5 = vector.broadcast %4 : vector<1x128xf32> to vector<128x128xf32>
    %6 = arith.addf %3, %5 : vector<128x128xf32>
    %cst_6 = arith.constant 0.000000e+00 : f32
    %7 = vector.broadcast %cst_6 : f32 to vector<128x128xf32>
    %8 = arith.maximumf %6, %7 : vector<128x128xf32>
    %9 = arith.truncf %8 : vector<128x128xf32> to vector<128x128xbf16>
    %c0_7 = arith.constant 0 : index
    %c0_8 = arith.constant 0 : index
    %10 = vector.load %arg5[%c0_7, %c0_8] : memref<128x64xbf16, #tpu.memory_space<vmem>>, vector<128x64xbf16>
    %cst_9 = arith.constant dense<0.000000e+00> : vector<128x64xf32>
    %11 = tpu.matmul %9, %10, %cst_9 {dimension_numbers = #tpu.dot_dimension_numbers<[1], [0], [0], [1], [0, 0, 1, 1], [], []>} : vector<128x128xbf16>, vector<128x64xbf16>, vector<128x64xf32> -> vector<128x64xf32>
    %12 = math.tanh %11 : vector<128x64xf32>
    %c0_10 = arith.constant 0 : index
    %c0_11 = arith.constant 0 : index
    %13 = vector.load %arg6[%c0_10, %c0_11] : memref<1x64xf32, #tpu.memory_space<vmem>>, vector<1x64xf32>
    %14 = vector.broadcast %13 : vector<1x64xf32> to vector<128x64xf32>
    %15 = arith.mulf %12, %14 : vector<128x64xf32>
    %cst_12 = arith.constant dense<0.000000e+00> : vector<128xf32>
    %16 = vector.multi_reduction <add>, %15, %cst_12 [1] : vector<128x64xf32> to vector<128xf32>
    %17 = vector.shape_cast %16 : vector<128xf32> to vector<128x1xf32>
    %18 = vector.shape_cast %17 : vector<128x1xf32> to vector<16x8xf32>
    %c0_13 = arith.constant 0 : index
    %c0_14 = arith.constant 0 : index
    %19 = vector.load %arg2[%c0_13, %c0_14] : memref<16x8xf32, #tpu.memory_space<vmem>>, vector<16x8xf32>
    %20 = arith.addf %18, %19 : vector<16x8xf32>
    %cst_15 = arith.constant dense<0xFF800000> : vector<16xf32>
    %21 = vector.multi_reduction <maximumf>, %20, %cst_15 [1] : vector<16x8xf32> to vector<16xf32>
    %22 = vector.shape_cast %21 : vector<16xf32> to vector<16x1xf32>
    %23 = vector.broadcast %22 : vector<16x1xf32> to vector<16x8xf32>
    %24 = arith.subf %20, %23 : vector<16x8xf32>
    %25 = math.exp %24 : vector<16x8xf32>
    %cst_16 = arith.constant dense<0.000000e+00> : vector<16xf32>
    %26 = vector.multi_reduction <add>, %25, %cst_16 [1] : vector<16x8xf32> to vector<16xf32>
    %27 = vector.shape_cast %26 : vector<16xf32> to vector<16x1xf32>
    %28 = tpu.reciprocal %27 {approx = true} : vector<16x1xf32> -> vector<16x1xf32>
    %29 = vector.broadcast %28 : vector<16x1xf32> to vector<16x8xf32>
    %30 = arith.mulf %25, %29 : vector<16x8xf32>
    %31 = vector.shape_cast %8 : vector<128x128xf32> to vector<16x8x128xf32>
    %32 = vector.shape_cast %30 : vector<16x8xf32> to vector<16x8x1xf32>
    %33 = vector.broadcast %32 : vector<16x8x1xf32> to vector<16x8x128xf32>
    %34 = arith.mulf %31, %33 : vector<16x8x128xf32>
    %cst_17 = arith.constant dense<0.000000e+00> : vector<16x128xf32>
    %35 = vector.multi_reduction <add>, %34, %cst_17 [1] : vector<16x8x128xf32> to vector<16x128xf32>
    %36 = arith.truncf %35 : vector<16x128xf32> to vector<16x128xbf16>
    %c0_18 = arith.constant 0 : index
    %c0_19 = arith.constant 0 : index
    %37 = vector.load %arg7[%c0_18, %c0_19] : memref<16x128xbf16, #tpu.memory_space<vmem>>, vector<16x128xbf16>
    tpu.vector_store %arg7[%c0_18, %c0_19], %36 {strides = array<i32>} : memref<16x128xbf16, #tpu.memory_space<vmem>>, vector<16x128xbf16>,
    return
  }
  func.func @transform_0(%arg0: i32) -> (i32, i32, i32) {
    %c0_i32 = arith.constant 0 : i32
    %c0_i32_0 = arith.constant 0 : i32
    %c0_i32_1 = arith.constant 0 : i32
    return %arg0, %c0_i32, %c0_i32_0 : i32, i32, i32
  }
  func.func @transform_1(%arg0: i32) -> (i32, i32) {
    %c0_i32 = arith.constant 0 : i32
    %c0_i32_0 = arith.constant 0 : i32
    return %arg0, %c0_i32 : i32, i32
  }
  func.func @transform_2(%arg0: i32) -> (i32, i32) {
    %c0_i32 = arith.constant 0 : i32
    %c0_i32_0 = arith.constant 0 : i32
    %c0_i32_1 = arith.constant 0 : i32
    return %c0_i32, %c0_i32_0 : i32, i32
  }
  func.func @transform_3(%arg0: i32) -> (i32, i32) {
    %c0_i32 = arith.constant 0 : i32
    %c0_i32_0 = arith.constant 0 : i32
    %c0_i32_1 = arith.constant 0 : i32
    return %c0_i32, %c0_i32_0 : i32, i32
  }
  func.func @transform_4(%arg0: i32) -> (i32, i32) {
    %c0_i32 = arith.constant 0 : i32
    %c0_i32_0 = arith.constant 0 : i32
    %c0_i32_1 = arith.constant 0 : i32
    return %c0_i32, %c0_i32_0 : i32, i32
  }
  func.func @transform_5(%arg0: i32) -> (i32, i32) {
    %c0_i32 = arith.constant 0 : i32
    %c0_i32_0 = arith.constant 0 : i32
    %c0_i32_1 = arith.constant 0 : i32
    return %c0_i32, %c0_i32_0 : i32, i32
  }
  func.func @transform_6(%arg0: i32) -> (i32, i32) {
    %c0_i32 = arith.constant 0 : i32
    %c0_i32_0 = arith.constant 0 : i32
    return %arg0, %c0_i32 : i32, i32
  }
}

module attributes {stable_mosaic.version = 11 : i64} {
  func.func @_graph_logits_kernel(%arg0: i32, %arg1: memref<2x4x128xbf16, #tpu.memory_space<vmem>>, %arg2: memref<2x4x4xf32, #tpu.memory_space<vmem>>, %arg3: memref<1x4x128xbf16, #tpu.memory_space<vmem>>, %arg4: memref<128x128xbf16, #tpu.memory_space<vmem>>, %arg5: memref<128x128xbf16, #tpu.memory_space<vmem>>, %arg6: memref<1x1x2xf32, #tpu.memory_space<vmem>>) attributes {dimension_semantics = [#tpu.dimension_semantics<parallel>], iteration_bounds = array<i64: 2>, scalar_prefetch = 0 : i64, scratch_operands = 0 : i64, tpu.core_type = #tpu.core_type<tc>, window_params = [{transform_indices = @transform_0, window_bounds = array<i64: 2, 4, 128>}, {transform_indices = @transform_1, window_bounds = array<i64: 2, 4, 4>}, {transform_indices = @transform_2, window_bounds = array<i64: 1, 4, 128>}, {pipeline_mode = #tpu.pipeline_mode<synchronous>, transform_indices = @transform_3, window_bounds = array<i64: 128, 128>}, {pipeline_mode = #tpu.pipeline_mode<synchronous>, transform_indices = @transform_4, window_bounds = array<i64: 128, 128>}, {transform_indices = @transform_5, window_bounds = array<i64: 1, 1, 2>}]} {
    %c0 = arith.constant 0 : index
    %c0_0 = arith.constant 0 : index
    %c0_1 = arith.constant 0 : index
    %0 = vector.load %arg1[%c0, %c0_0, %c0_1] : memref<2x4x128xbf16, #tpu.memory_space<vmem>>, vector<2x4x128xbf16>
    %c0_2 = arith.constant 0 : index
    %c0_3 = arith.constant 0 : index
    %c0_4 = arith.constant 0 : index
    %1 = vector.load %arg2[%c0_2, %c0_3, %c0_4] : memref<2x4x4xf32, #tpu.memory_space<vmem>>, vector<2x4x4xf32>
    %c0_5 = arith.constant 0 : index
    %c0_6 = arith.constant 0 : index
    %c0_7 = arith.constant 0 : index
    %2 = vector.load %arg3[%c0_5, %c0_6, %c0_7] : memref<1x4x128xbf16, #tpu.memory_space<vmem>>, vector<1x4x128xbf16>
    %3 = vector.shape_cast %0 : vector<2x4x128xbf16> to vector<8x128xbf16>
    %c0_8 = arith.constant 0 : index
    %c0_9 = arith.constant 0 : index
    %4 = vector.load %arg4[%c0_8, %c0_9] : memref<128x128xbf16, #tpu.memory_space<vmem>>, vector<128x128xbf16>
    %cst = arith.constant dense<0.000000e+00> : vector<8x128xf32>
    %5 = tpu.matmul %3, %4, %cst {dimension_numbers = #tpu.dot_dimension_numbers<[1], [0], [0], [1], [0, 0, 1, 1], [], []>} : vector<8x128xbf16>, vector<128x128xbf16>, vector<8x128xf32> -> vector<8x128xf32>
    %c0_10 = arith.constant 0 : index
    %c0_11 = arith.constant 0 : index
    %6 = vector.load %arg5[%c0_10, %c0_11] : memref<128x128xbf16, #tpu.memory_space<vmem>>, vector<128x128xbf16>
    %cst_12 = arith.constant dense<0.000000e+00> : vector<8x128xf32>
    %7 = tpu.matmul %3, %6, %cst_12 {dimension_numbers = #tpu.dot_dimension_numbers<[1], [0], [0], [1], [0, 0, 1, 1], [], []>} : vector<8x128xbf16>, vector<128x128xbf16>, vector<8x128xf32> -> vector<8x128xf32>
    %8 = vector.shape_cast %5 : vector<8x128xf32> to vector<2x4x128xf32>
    %9 = arith.truncf %8 : vector<2x4x128xf32> to vector<2x4x128xbf16>
    %10 = vector.shape_cast %7 : vector<8x128xf32> to vector<2x4x128xf32>
    %11 = arith.truncf %10 : vector<2x4x128xf32> to vector<2x4x128xbf16>
    "tpu.trace_start"() <{level = 10 : i32, message = "ngf,nhf->ngh"}> : () -> ()
    %cst_13 = arith.constant dense<0.000000e+00> : vector<2x4x4xf32>
    %12 = tpu.matmul %9, %11, %cst_13 {dimension_numbers = #tpu.dot_dimension_numbers<[2], [2], [1], [1], [0, 0, 0, 1, 1, 1], [0], [0]>} : vector<2x4x128xbf16>, vector<2x4x128xbf16>, vector<2x4x4xf32> -> vector<2x4x4xf32>
    "tpu.trace_stop"() : () -> ()
    %cst_14 = arith.constant 0.0883883461 : f32
    %13 = vector.broadcast %cst_14 : f32 to vector<2x4x4xf32>
    %14 = arith.mulf %12, %13 : vector<2x4x4xf32>
    %15 = arith.addf %14, %1 : vector<2x4x4xf32>
    %cst_15 = arith.constant dense<0xFF800000> : vector<2x4xf32>
    %16 = vector.multi_reduction <maximumf>, %15, %cst_15 [2] : vector<2x4x4xf32> to vector<2x4xf32>
    %17 = vector.shape_cast %16 : vector<2x4xf32> to vector<2x4x1xf32>
    %18 = vector.broadcast %17 : vector<2x4x1xf32> to vector<2x4x4xf32>
    %19 = arith.subf %15, %18 : vector<2x4x4xf32>
    %20 = math.exp %19 : vector<2x4x4xf32>
    %cst_16 = arith.constant dense<0.000000e+00> : vector<2x4xf32>
    %21 = vector.multi_reduction <add>, %20, %cst_16 [2] : vector<2x4x4xf32> to vector<2x4xf32>
    %22 = vector.shape_cast %21 : vector<2x4xf32> to vector<2x4x1xf32>
    %23 = tpu.reciprocal %22 {approx = true} : vector<2x4x1xf32> -> vector<2x4x1xf32>
    %24 = vector.broadcast %23 : vector<2x4x1xf32> to vector<2x4x4xf32>
    %25 = arith.mulf %20, %24 : vector<2x4x4xf32>
    %26 = arith.truncf %25 : vector<2x4x4xf32> to vector<2x4x4xbf16>
    "tpu.trace_start"() <{level = 10 : i32, message = "ngh,nhf->ngf"}> : () -> ()
    %cst_17 = arith.constant dense<0.000000e+00> : vector<2x4x128xf32>
    %27 = tpu.matmul %26, %0, %cst_17 {dimension_numbers = #tpu.dot_dimension_numbers<[2], [1], [1], [2], [0, 0, 0, 1, 1, 2], [0], [0]>} : vector<2x4x4xbf16>, vector<2x4x128xbf16>, vector<2x4x128xf32> -> vector<2x4x128xf32>
    "tpu.trace_stop"() : () -> ()
    %28 = vector.extract_strided_slice %27 {offsets = [0, 0, 0], sizes = [2, 1, 128], strides = [1, 1, 1]} : vector<2x4x128xf32> to vector<2x1x128xf32>
    %29 = vector.shape_cast %28 : vector<2x1x128xf32> to vector<2x128xf32>
    %30 = vector.shape_cast %29 : vector<2x128xf32> to vector<1x2x128xf32>
    %31 = arith.truncf %30 : vector<1x2x128xf32> to vector<1x2x128xbf16>
    "tpu.trace_start"() <{level = 10 : i32, message = "bnf,bhf->bnh"}> : () -> ()
    %cst_18 = arith.constant dense<0.000000e+00> : vector<1x2x4xf32>
    %32 = tpu.matmul %31, %2, %cst_18 {dimension_numbers = #tpu.dot_dimension_numbers<[2], [2], [1], [1], [0, 0, 0, 1, 1, 1], [0], [0]>} : vector<1x2x128xbf16>, vector<1x4x128xbf16>, vector<1x2x4xf32> -> vector<1x2x4xf32>
    "tpu.trace_stop"() : () -> ()
    %cst_19 = arith.constant dense<0xFF800000> : vector<1x2xf32>
    %33 = vector.multi_reduction <maximumf>, %32, %cst_19 [2] : vector<1x2x4xf32> to vector<1x2xf32>
    %34 = vector.shape_cast %33 : vector<1x2xf32> to vector<1x2x1xf32>
    %35 = vector.broadcast %34 : vector<1x2x1xf32> to vector<1x2x4xf32>
    %36 = arith.subf %32, %35 : vector<1x2x4xf32>
    %37 = math.exp %36 : vector<1x2x4xf32>
    %cst_20 = arith.constant dense<0.000000e+00> : vector<1x2xf32>
    %38 = vector.multi_reduction <add>, %37, %cst_20 [2] : vector<1x2x4xf32> to vector<1x2xf32>
    %39 = vector.shape_cast %38 : vector<1x2xf32> to vector<1x2x1xf32>
    %40 = tpu.reciprocal %39 {approx = true} : vector<1x2x1xf32> -> vector<1x2x1xf32>
    %41 = vector.broadcast %40 : vector<1x2x1xf32> to vector<1x2x4xf32>
    %42 = arith.mulf %37, %41 : vector<1x2x4xf32>
    %43 = arith.truncf %42 : vector<1x2x4xf32> to vector<1x2x4xbf16>
    "tpu.trace_start"() <{level = 10 : i32, message = "bnh,bhf->bnf"}> : () -> ()
    %cst_21 = arith.constant dense<0.000000e+00> : vector<1x2x128xf32>
    %44 = tpu.matmul %43, %2, %cst_21 {dimension_numbers = #tpu.dot_dimension_numbers<[2], [1], [1], [2], [0, 0, 0, 1, 1, 2], [0], [0]>} : vector<1x2x4xbf16>, vector<1x4x128xbf16>, vector<1x2x128xf32> -> vector<1x2x128xf32>
    "tpu.trace_stop"() : () -> ()
    %45 = arith.mulf %44, %30 : vector<1x2x128xf32>
    %cst_22 = arith.constant dense<0.000000e+00> : vector<1x2xf32>
    %46 = vector.multi_reduction <add>, %45, %cst_22 [2] : vector<1x2x128xf32> to vector<1x2xf32>
    %47 = vector.shape_cast %46 : vector<1x2xf32> to vector<1x1x2xf32>
    %c0_23 = arith.constant 0 : index
    %c0_24 = arith.constant 0 : index
    %c0_25 = arith.constant 0 : index
    %48 = vector.load %arg6[%c0_23, %c0_24, %c0_25] : memref<1x1x2xf32, #tpu.memory_space<vmem>>, vector<1x1x2xf32>
    tpu.vector_store %arg6[%c0_23, %c0_24, %c0_25], %47 {strides = array<i32>} : memref<1x1x2xf32, #tpu.memory_space<vmem>>, vector<1x1x2xf32>,
    return
  }
  func.func @transform_0(%arg0: i32) -> (i32, i32, i32) {
    %c0_i32 = arith.constant 0 : i32
    %c0_i32_0 = arith.constant 0 : i32
    %c0_i32_1 = arith.constant 0 : i32
    return %arg0, %c0_i32, %c0_i32_0 : i32, i32, i32
  }
  func.func @transform_1(%arg0: i32) -> (i32, i32, i32) {
    %c0_i32 = arith.constant 0 : i32
    %c0_i32_0 = arith.constant 0 : i32
    %c0_i32_1 = arith.constant 0 : i32
    return %arg0, %c0_i32, %c0_i32_0 : i32, i32, i32
  }
  func.func @transform_2(%arg0: i32) -> (i32, i32, i32) {
    %c0_i32 = arith.constant 0 : i32
    %c0_i32_0 = arith.constant 0 : i32
    %c0_i32_1 = arith.constant 0 : i32
    return %arg0, %c0_i32, %c0_i32_0 : i32, i32, i32
  }
  func.func @transform_3(%arg0: i32) -> (i32, i32) {
    %c0_i32 = arith.constant 0 : i32
    %c0_i32_0 = arith.constant 0 : i32
    %c0_i32_1 = arith.constant 0 : i32
    return %c0_i32, %c0_i32_0 : i32, i32
  }
  func.func @transform_4(%arg0: i32) -> (i32, i32) {
    %c0_i32 = arith.constant 0 : i32
    %c0_i32_0 = arith.constant 0 : i32
    %c0_i32_1 = arith.constant 0 : i32
    return %c0_i32, %c0_i32_0 : i32, i32
  }
  func.func @transform_5(%arg0: i32) -> (i32, i32, i32) {
    %c0_i32 = arith.constant 0 : i32
    %c0_i32_0 = arith.constant 0 : i32
    %c0_i32_1 = arith.constant 0 : i32
    return %arg0, %c0_i32, %c0_i32_0 : i32, i32, i32
  }
}

</mosaic_0001>

<llo_original>
// kernel: model_forward.3
$region0: #{model_forward.3}
  #allocation0 [shape = 'u32[]', space=smem, size = 0x4, offset = 0x4, fixed_abs, tag = 'smem constant byte address 0x4 - core index']
  #allocation1 [shape = 'u32[144,128]{1,0:T(1,128)}', space=vmem, size = 0x12000, scoped, tag = 'internal scratch']
  %s0 = inlined_call_operand.vmem [shape: bf16[4,4,128], index: 0, kind: input, shape index: {}]
  %s1 = inlined_call_operand.vmem [shape: f32[4,4,4], index: 1, kind: input, shape index: {}]
  %s2 = inlined_call_operand.vmem [shape: bf16[2,4,128], index: 2, kind: input, shape index: {}]
  %s3 = inlined_call_operand.vmem [shape: bf16[128,128], index: 3, kind: input, shape index: {}]
  %s4 = inlined_call_operand.vmem [shape: bf16[128,128], index: 4, kind: input, shape index: {}]
  %s5 = inlined_call_operand.hbm [shape: f32[2,1,2], index: 5, kind: output, shape index: {}]
  %s6 = sld [smem:[#allocation0]]
  $region53: #{model_forward.3} parent=0
    _
  %s8 = ssub.s32 1, %s6
  %s9 = scalar_select 0, %s8, %s6
  $region1: #{model_forward.3} parent=0
    #allocation2 [shape = 'u8[1024]{0}', space=vmem, size = 0x400, scoped, tag = 'output window, operand 0']
    #allocation3 [shape = 's32[2]{0}', space=sflag, size = 0x8, scoped, tag = 'scoped memory for model_forward.3']
    %10 = vsyncpa [#allocation3], 0
    %s11 = scalar_lea.sflag [#allocation3], 1
    %12 = vsyncpa %s11, 0
    loop: start=0, step=1, limit=4
    $region2: #{model_forward.3} parent=1 // loop_pre_header
      _
    $region3: #{model_forward.3} parent=1 // loop_header
      %s14 = sphi 0, %s18
      %p15 = scmp.ge.s32.totalorder %s14, 4
      %s24 = sphi 0, %s26
      %s27 = sphi 0, %s24
      %s28 = sphi 0, %s27
      %s44 = sphi 0, %s28
      %s50 = sphi 0, %s52
      %s53 = sphi 0, %s50
      %s54 = sphi 0, %s53
      %s70 = sphi 0, %s54
      %s76 = sphi 0, %s78
      %s79 = sphi 0, %s76
      %s80 = sphi 0, %s79
      %s96 = sphi 0, %s80
      %s100 = sphi 0, %s100
      %s102 = sphi 0, %s100
      %s103 = sphi 0, %s102
      %s117 = sphi 0, %s103
      %s121 = sphi 0, %s121
      %s123 = sphi 0, %s121
      %s124 = sphi 0, %s123
      %s138 = sphi 0, %s124
      %s144 = sphi 0, %s146
      %s147 = sphi 0, %s144
      %s148 = sphi 0, %s147
      %s164 = sphi 0, %s148
    $region4: #{model_forward.3} parent=1 // loop_header_branch
      %17 = sbr.rel (%p15) target = $region8
    $region5: #{model_forward.3} parent=1 // loop_body
      %s19 = ssub.s32 %s14, 1
      %s20 = ssub.s32 %s14, 2
      %s21 = sadd.s32 %s14, 1
      %s22 = ssub.s32 %s14, %s21
      %p23 = scmp.eq.s32.totalorder %s22, 0
      %s25 = sadd.s32 %s24, 1
      %s26 = scalar_select %p23, %s24, %s25
      %p29 = pneg %p23
      %p30 = scmp.eq.s32.totalorder %s14, 1
      %p31 = por %p29, %p30
      %p32 = scmp.ne.s32.totalorder %s24, %s27
      %p33 = scmp.eq.s32.totalorder %s14, 0
      %p34 = por %p32, %p33
      %p35 = scmp.ne.s32.totalorder %s24, %s27
      %p36 = scmp.eq.s32.totalorder %s19, 1
      %p37 = por %p35, %p36
      %p38 = scmp.ne.s32.totalorder %s27, %s28
      %p39 = scmp.eq.s32.totalorder %s19, 0
      %p40 = por %p38, %p39
      %p41 = scmp.ne.s32.totalorder %s27, %s28
      %p42 = scmp.eq.s32.totalorder %s20, 1
      %p43 = por %p41, %p42
      %p45 = scmp.ne.s32.totalorder %s28, %s44
      %p46 = scmp.eq.s32.totalorder %s20, 0
      %p47 = por %p45, %p46
      %s48 = ssub.s32 %s14, %s21
      %p49 = scmp.eq.s32.totalorder %s48, 0
      %s51 = sadd.s32 %s50, 1
      %s52 = scalar_select %p49, %s50, %s51
      %p55 = pneg %p49
      %p56 = scmp.eq.s32.totalorder %s14, 1
      %p57 = por %p55, %p56
      %p58 = scmp.ne.s32.totalorder %s50, %s53
      %p59 = scmp.eq.s32.totalorder %s14, 0
      %p60 = por %p58, %p59
      %p61 = scmp.ne.s32.totalorder %s50, %s53
      %p62 = scmp.eq.s32.totalorder %s19, 1
      %p63 = por %p61, %p62
      %p64 = scmp.ne.s32.totalorder %s53, %s54
      %p65 = scmp.eq.s32.totalorder %s19, 0
      %p66 = por %p64, %p65
      %p67 = scmp.ne.s32.totalorder %s53, %s54
      %p68 = scmp.eq.s32.totalorder %s20, 1
      %p69 = por %p67, %p68
      %p71 = scmp.ne.s32.totalorder %s54, %s70
      %p72 = scmp.eq.s32.totalorder %s20, 0
      %p73 = por %p71, %p72
      %s74 = ssub.s32 %s14, %s21
      %p75 = scmp.eq.s32.totalorder %s74, 0
      %s77 = sadd.s32 %s76, 1
      %s78 = scalar_select %p75, %s76, %s77
      %p81 = pneg %p75
      %p82 = scmp.eq.s32.totalorder %s14, 1
      %p83 = por %p81, %p82
      %p84 = scmp.ne.s32.totalorder %s76, %s79
      %p85 = scmp.eq.s32.totalorder %s14, 0
      %p86 = por %p84, %p85
      %p87 = scmp.ne.s32.totalorder %s76, %s79
      %p88 = scmp.eq.s32.totalorder %s19, 1
      %p89 = por %p87, %p88
      %p90 = scmp.ne.s32.totalorder %s79, %s80
      %p91 = scmp.eq.s32.totalorder %s19, 0
      %p92 = por %p90, %p91
      %p93 = scmp.ne.s32.totalorder %s79, %s80
      %p94 = scmp.eq.s32.totalorder %s20, 1
      %p95 = por %p93, %p94
      %p97 = scmp.ne.s32.totalorder %s80, %s96
      %p98 = scmp.eq.s32.totalorder %s20, 0
      %p99 = por %p97, %p98
      %s101 = sadd.s32 %s100, 1
      %p104 = scmp.eq.s32.totalorder %s14, 1
      %p105 = scmp.ne.s32.totalorder %s100, %s102
      %p106 = scmp.eq.s32.totalorder %s14, 0
      %p107 = por %p105, %p106
      %p108 = scmp.ne.s32.totalorder %s100, %s102
      %p109 = scmp.eq.s32.totalorder %s19, 1
      %p110 = por %p108, %p109
      %p111 = scmp.ne.s32.totalorder %s102, %s103
      %p112 = scmp.eq.s32.totalorder %s19, 0
      %p113 = por %p111, %p112
      %p114 = scmp.ne.s32.totalorder %s102, %s103
      %p115 = scmp.eq.s32.totalorder %s20, 1
      %p116 = por %p114, %p115
      %p118 = scmp.ne.s32.totalorder %s103, %s117
      %p119 = scmp.eq.s32.totalorder %s20, 0
      %p120 = por %p118, %p119
      %s122 = sadd.s32 %s121, 1
      %p125 = scmp.eq.s32.totalorder %s14, 1
      %p126 = scmp.ne.s32.totalorder %s121, %s123
      %p127 = scmp.eq.s32.totalorder %s14, 0
      %p128 = por %p126, %p127
      %p129 = scmp.ne.s32.totalorder %s121, %s123
      %p130 = scmp.eq.s32.totalorder %s19, 1
      %p131 = por %p129, %p130
      %p132 = scmp.ne.s32.totalorder %s123, %s124
      %p133 = scmp.eq.s32.totalorder %s19, 0
      %p134 = por %p132, %p133
      %p135 = scmp.ne.s32.totalorder %s123, %s124
      %p136 = scmp.eq.s32.totalorder %s20, 1
      %p137 = por %p135, %p136
      %p139 = scmp.ne.s32.totalorder %s124, %s138
      %p140 = scmp.eq.s32.totalorder %s20, 0
      %p141 = por %p139, %p140
      %s142 = ssub.s32 %s14, %s21
      %p143 = scmp.eq.s32.totalorder %s142, 0
      %s145 = sadd.s32 %s144, 1
      %s146 = scalar_select %p143, %s144, %s145
      %p149 = pneg %p143
      %p150 = scmp.eq.s32.totalorder %s14, 1
      %p151 = por %p149, %p150
      %p152 = scmp.ne.s32.totalorder %s144, %s147
      %p153 = scmp.eq.s32.totalorder %s14, 0
      %p154 = por %p152, %p153
      %p155 = scmp.ne.s32.totalorder %s144, %s147
      %p156 = scmp.eq.s32.totalorder %s19, 1
      %p157 = por %p155, %p156
      %p158 = scmp.ne.s32.totalorder %s147, %s148
      %p159 = scmp.eq.s32.totalorder %s19, 0
      %p160 = por %p158, %p159
      %p161 = scmp.ne.s32.totalorder %s147, %s148
      %p162 = scmp.eq.s32.totalorder %s20, 1
      %p163 = por %p161, %p162
      %p165 = scmp.ne.s32.totalorder %s148, %s164
      %p166 = scmp.eq.s32.totalorder %s20, 0
      %p167 = por %p165, %p166
      %p168 = scmp.le.s32.totalorder 1, %s14
      %p169 = scmp.lt.s32.totalorder %s14, 3
      %p170 = pnand %p168, %p169
      %p171 = pneg %p170
      // Predicated region
      $region9: #{model_forward.3} parent=5 // pred_check
        _
      $region10: #{model_forward.3} parent=5 // pred_check_branch
        %173 = sbr.rel (%p170) target = $region12
      $region11: #{model_forward.3} parent=5 // pred_region
        %s174 = ssub.s32 %s14, 1
        // Predicated region
        $region13: #{model_forward.3} parent=11 // pred_check
          %p175 = pneg %p113
        $region14: #{model_forward.3} parent=11 // pred_check_branch
          %177 = sbr.rel (%p175) target = $region16
        $region15: #{model_forward.3} parent=11 // pred_region
          _
        $region16: #{model_forward.3} parent=11 // pred_fallthru
          _
        // Predicated region
        $region17: #{model_forward.3} parent=11 // pred_check
          %p178 = pneg %p134
        $region18: #{model_forward.3} parent=11 // pred_check_branch
          %180 = sbr.rel (%p178) target = $region20
        $region19: #{model_forward.3} parent=11 // pred_region
          _
        $region20: #{model_forward.3} parent=11 // pred_fallthru
          _
      $region12: #{model_forward.3} parent=5 // pred_fallthru
        _
      %p181 = scmp.lt.s32.totalorder %s14, 2
      // Predicated region
      $region21: #{model_forward.3} parent=5 // pred_check
        %p182 = pneg %p181
      $region22: #{model_forward.3} parent=5 // pred_check_branch
        %184 = sbr.rel (%p182) target = $region24
      $region23: #{model_forward.3} parent=5 // pred_region
        // Predicated region
        $region25: #{model_forward.3} parent=23 // pred_check
          %p185 = pneg %p34
        $region26: #{model_forward.3} parent=23 // pred_check_branch
          %187 = sbr.rel (%p185) target = $region28
        $region27: #{model_forward.3} parent=23 // pred_region
          %s188 = smul.u32 2, %s14
          %p189 = scmp.lt.s32.totalorder %s188, 3
          %s190 = scalar_select %p189, %s188, 3
          %s191 = smul.addr %s190, 2
          %s192 = scalar_lea.vmem %s0, %s191
          %s193 = smul.u32 2, %s14
        $region28: #{model_forward.3} parent=23 // pred_fallthru
          _
        // Predicated region
        $region29: #{model_forward.3} parent=23 // pred_check
          %p194 = pneg %p60
        $region30: #{model_forward.3} parent=23 // pred_check_branch
          %196 = sbr.rel (%p194) target = $region32
        $region31: #{model_forward.3} parent=23 // pred_region
          %s197 = smul.u32 2, %s14
          %p198 = scmp.lt.s32.totalorder %s197, 3
          %s199 = scalar_select %p198, %s197, 3
          %s200 = smul.addr %s199, 4
          %s201 = scalar_lea.vmem %s1, %s200
          %s202 = smul.u32 2, %s14
        $region32: #{model_forward.3} parent=23 // pred_fallthru
          _
        // Predicated region
        $region33: #{model_forward.3} parent=23 // pred_check
          %p203 = pneg %p86
        $region34: #{model_forward.3} parent=23 // pred_check_branch
          %205 = sbr.rel (%p203) target = $region36
        $region35: #{model_forward.3} parent=23 // pred_region
          %p206 = scmp.lt.s32.totalorder %s14, 1
          %s207 = scalar_select %p206, %s14, 1
          %s208 = smul.addr %s207, 2
          %s209 = scalar_lea.vmem %s2, %s208
        $region36: #{model_forward.3} parent=23 // pred_fallthru
          _
      $region24: #{model_forward.3} parent=5 // pred_fallthru
        _
      %p210 = scmp.le.s32.totalorder 1, %s14
      %p211 = scmp.lt.s32.totalorder %s14, 3
      %p212 = pnand %p210, %p211
      %p213 = pneg %p212
      // Predicated region
      $region37: #{model_forward.3} parent=5 // pred_check
        _
      $region38: #{model_forward.3} parent=5 // pred_check_branch
        %215 = sbr.rel (%p212) target = $region40
      $region39: #{model_forward.3} parent=5 // pred_region
        %s216 = ssub.s32 %s14, 1
        %s217 = smul.u32 2, %s19
        %p218 = scmp.lt.s32.totalorder %s217, 3
        %s219 = scalar_select %p218, %s217, 3
        %s220 = smul.addr %s219, 2
        %s221 = scalar_lea.vmem %s0, %s220
        %p222 = pneg %p40
        %p223 = pneg %p37
        %s224 = smul.u32 2, %s19
        %p225 = scmp.lt.s32.totalorder %s224, 3
        %s226 = scalar_select %p225, %s224, 3
        %s227 = smul.addr %s226, 4
        %s228 = scalar_lea.vmem %s1, %s227
        %p229 = pneg %p66
        %p230 = pneg %p63
        %p231 = scmp.lt.s32.totalorder %s19, 1
        %s232 = scalar_select %p231, %s19, 1
        %s233 = smul.addr %s232, 2
        %s234 = scalar_lea.vmem %s2, %s233
        %p235 = pneg %p92
        %p236 = pneg %p89
        %p237 = pneg %p113
        %p238 = pneg %p110
        %p239 = pneg %p134
        %p240 = pneg %p131
        %p241 = pneg %p160
        %p242 = pneg %p157
        %s243 = sand.u32 %s147, 1
        %s244 = scalar_lea.sflag [#allocation3], %s243
        %s245 = sand.u32 %s147, 1
        %s246 = scalar_lea.vmem [#allocation2], %s245
        %s247 = smul.u32 2, %s19
        %p248 = scmp.lt.s32.totalorder %s247, 3
        %s249 = scalar_select %p248, %s247, 3
        %s250 = smul.addr %s249, 2
        %s251 = scalar_lea.vmem %s0, %s250
        %s252 = smul.u32 2, %s19
        %s253 = smul.u32 2, %s19
        %p254 = scmp.lt.s32.totalorder %s253, 3
        %s255 = scalar_select %p254, %s253, 3
        %s256 = smul.addr %s255, 4
        %s257 = scalar_lea.vmem %s1, %s256
        %s258 = smul.u32 2, %s19
        %p259 = scmp.lt.s32.totalorder %s19, 1
        %s260 = scalar_select %p259, %s19, 1
        %s261 = smul.addr %s260, 2
        %s262 = scalar_lea.vmem %s2, %s261
        %v264 = vld [vmem:[%s251] sm:$0x3]
        %v265 = vld [vmem:[%s251 + $0x2] sm:$0x3]
        %v266 = vld [vmem:[%s257] sm:$0xf]
        %v267 = vld [vmem:[%s257 + $0x4] sm:$0xf]
        %v268 = vld [vmem:[%s262] sm:$0x3]
        %v269 = vld [vmem:[%s3] sm:$0xf]
        %v270 = vld [vmem:[%s3 + $0x4] sm:$0xf]
        %v271 = vld [vmem:[%s3 + $0x8] sm:$0xf]
        %v272 = vld [vmem:[%s3 + $0xc] sm:$0xf]
        %v273 = vld [vmem:[%s3 + $0x10] sm:$0xf]
        %v274 = vld [vmem:[%s3 + $0x14] sm:$0xf]
        %v275 = vld [vmem:[%s3 + $0x18] sm:$0xf]
        %v276 = vld [vmem:[%s3 + $0x1c] sm:$0xf]
        %v277 = vld [vmem:[%s3 + $0x20] sm:$0xf]
        %v278 = vld [vmem:[%s3 + $0x24] sm:$0xf]
        %v279 = vld [vmem:[%s3 + $0x28] sm:$0xf]
        %v280 = vld [vmem:[%s3 + $0x2c] sm:$0xf]
        %v281 = vld [vmem:[%s3 + $0x30] sm:$0xf]
        %v282 = vld [vmem:[%s3 + $0x34] sm:$0xf]
        %v283 = vld [vmem:[%s3 + $0x38] sm:$0xf]
        %v284 = vld [vmem:[%s3 + $0x3c] sm:$0xf]
        %v287 = vcombine.low %v264, %v265
        %v289 = vunpack.c.l.s4 1983009808
        %v290 = vunpack.c.0.s8 %v289
        %v291 = vlaneseq
        %v292 = vshrl.u32 %v291, 7
        %v293 = vsub.s32 %v290, %v292
        %v294 = vrot.slane %v287, %v293
        %v312 = vunpack.c.l.b16 %v269
        %v313 = vunpack.c.l.b16 %v270
        %v314 = vunpack.c.l.b16 %v271
        %v315 = vunpack.c.l.b16 %v272
        %v316 = vunpack.c.l.b16 %v273
        %v317 = vunpack.c.l.b16 %v274
        %v318 = vunpack.c.l.b16 %v275
        %v319 = vunpack.c.l.b16 %v276
        %v320 = vunpack.c.l.b16 %v277
        %v321 = vunpack.c.l.b16 %v278
        %v322 = vunpack.c.l.b16 %v279
        %v323 = vunpack.c.l.b16 %v280
        %v324 = vunpack.c.l.b16 %v281
        %v325 = vunpack.c.l.b16 %v282
        %v326 = vunpack.c.l.b16 %v283
        %v327 = vunpack.c.l.b16 %v284
        %v328 = vpack.c.b16 %v313, %v312
        %v329 = vpack.c.b16 %v315, %v314
        %v330 = vpack.c.b16 %v317, %v316
        %v331 = vpack.c.b16 %v319, %v318
        %v332 = vpack.c.b16 %v321, %v320
        %v333 = vpack.c.b16 %v323, %v322
        %v334 = vpack.c.b16 %v325, %v324
        %v335 = vpack.c.b16 %v327, %v326
        %344 = vmatprep.subr.bf16.mxu0 0
        %345 = vmatpush1.bf16.msra.mxu0 %v328
        %346 = vmatprep.subr.bf16.mxu0 0
        %347 = vmatpush1.bf16.msra.mxu0 %v329
        %348 = vmatprep.subr.bf16.mxu0 0
        %349 = vmatpush1.bf16.msra.mxu0 %v330
        %350 = vmatprep.subr.bf16.mxu0 0
        %351 = vmatpush1.bf16.msra.mxu0 %v331
        %352 = vmatprep.subr.bf16.mxu0 0
        %353 = vmatpush1.bf16.msra.mxu0 %v332
        %354 = vmatprep.subr.bf16.mxu0 0
        %355 = vmatpush1.bf16.msra.mxu0 %v333
        %356 = vmatprep.subr.bf16.mxu0 0
        %357 = vmatpush1.bf16.msra.mxu0 %v334
        %358 = vmatprep.subr.bf16.mxu0 0
        %359 = vmatpush1.bf16.msra.mxu0 %v335
        %360 = vmatprep.subr.bf16.mxu0 0
        %361 = vmatpush1.bf16.msra.mxu0 0
        %362 = vmatprep.subr.bf16.mxu0 0
        %363 = vmatpush1.bf16.msra.mxu0 0
        %364 = vmatprep.subr.bf16.mxu0 0
        %365 = vmatpush1.bf16.msra.mxu0 0
        %366 = vmatprep.subr.bf16.mxu0 0
        %367 = vmatpush1.bf16.msra.mxu0 0
        %368 = vmatprep.subr.bf16.mxu0 0
        %369 = vmatpush1.bf16.msra.mxu0 0
        %370 = vmatprep.subr.bf16.mxu0 0
        %371 = vmatpush1.bf16.msra.mxu0 0
        %372 = vmatprep.subr.bf16.mxu0 0
        %373 = vmatpush1.bf16.msra.mxu0 0
        %374 = vmatprep.subr.bf16.mxu0 0
        %375 = vmatpush1.bf16.msra.mxu0 0
        %376 = vmatprep.mubr.bf16.mxu0 0
        %377 = vmatmul.mubr.bf16.gmra.mrb[0].mxu0 %v294
        %v378 = vpop.f32.mrb[0].mxu0
        %v379 = vadd.f32 0.0, %v378
        %v380 = vpop.f32.mrb[0].mxu0
        %v381 = vpop.f32.mrb[0].mxu0
        %v382 = vpop.f32.mrb[0].mxu0
        %383 = vdwg.mxu0
        %v384 = vld [vmem:[%s4] sm:$0xf]
        %v385 = vld [vmem:[%s4 + $0x4] sm:$0xf]
        %v386 = vld [vmem:[%s4 + $0x8] sm:$0xf]
        %v387 = vld [vmem:[%s4 + $0xc] sm:$0xf]
        %v388 = vld [vmem:[%s4 + $0x10] sm:$0xf]
        %v389 = vld [vmem:[%s4 + $0x14] sm:$0xf]
        %v390 = vld [vmem:[%s4 + $0x18] sm:$0xf]
        %v391 = vld [vmem:[%s4 + $0x1c] sm:$0xf]
        %v392 = vld [vmem:[%s4 + $0x20] sm:$0xf]
        %v393 = vld [vmem:[%s4 + $0x24] sm:$0xf]
        %v394 = vld [vmem:[%s4 + $0x28] sm:$0xf]
        %v395 = vld [vmem:[%s4 + $0x2c] sm:$0xf]
        %v396 = vld [vmem:[%s4 + $0x30] sm:$0xf]
        %v397 = vld [vmem:[%s4 + $0x34] sm:$0xf]
        %v398 = vld [vmem:[%s4 + $0x38] sm:$0xf]
        %v399 = vld [vmem:[%s4 + $0x3c] sm:$0xf]
        %v416 = vunpack.c.l.b16 %v384
        %v417 = vunpack.c.l.b16 %v385
        %v418 = vunpack.c.l.b16 %v386
        %v419 = vunpack.c.l.b16 %v387
        %v420 = vunpack.c.l.b16 %v388
        %v421 = vunpack.c.l.b16 %v389
        %v422 = vunpack.c.l.b16 %v390
        %v423 = vunpack.c.l.b16 %v391
        %v424 = vunpack.c.l.b16 %v392
        %v425 = vunpack.c.l.b16 %v393
        %v426 = vunpack.c.l.b16 %v394
        %v427 = vunpack.c.l.b16 %v395
        %v428 = vunpack.c.l.b16 %v396
        %v429 = vunpack.c.l.b16 %v397
        %v430 = vunpack.c.l.b16 %v398
        %v431 = vunpack.c.l.b16 %v399
        %v432 = vpack.c.b16 %v417, %v416
        %v433 = vpack.c.b16 %v419, %v418
        %v434 = vpack.c.b16 %v421, %v420
        %v435 = vpack.c.b16 %v423, %v422
        %v436 = vpack.c.b16 %v425, %v424
        %v437 = vpack.c.b16 %v427, %v426
        %v438 = vpack.c.b16 %v429, %v428
        %v439 = vpack.c.b16 %v431, %v430
        %448 = vmatprep.subr.bf16.mxu0 0
        %449 = vmatpush1.bf16.msra.mxu0 %v432
        %450 = vmatprep.subr.bf16.mxu0 0
        %451 = vmatpush1.bf16.msra.mxu0 %v433
        %452 = vmatprep.subr.bf16.mxu0 0
        %453 = vmatpush1.bf16.msra.mxu0 %v434
        %454 = vmatprep.subr.bf16.mxu0 0
        %455 = vmatpush1.bf16.msra.mxu0 %v435
        %456 = vmatprep.subr.bf16.mxu0 0
        %457 = vmatpush1.bf16.msra.mxu0 %v436
        %458 = vmatprep.subr.bf16.mxu0 0
        %459 = vmatpush1.bf16.msra.mxu0 %v437
        %460 = vmatprep.subr.bf16.mxu0 0
        %461 = vmatpush1.bf16.msra.mxu0 %v438
        %462 = vmatprep.subr.bf16.mxu0 0
        %463 = vmatpush1.bf16.msra.mxu0 %v439
        %464 = vmatprep.subr.bf16.mxu0 0
        %465 = vmatpush1.bf16.msra.mxu0 0
        %466 = vmatprep.subr.bf16.mxu0 0
        %467 = vmatpush1.bf16.msra.mxu0 0
        %468 = vmatprep.subr.bf16.mxu0 0
        %469 = vmatpush1.bf16.msra.mxu0 0
        %470 = vmatprep.subr.bf16.mxu0 0
        %471 = vmatpush1.bf16.msra.mxu0 0
        %472 = vmatprep.subr.bf16.mxu0 0
        %473 = vmatpush1.bf16.msra.mxu0 0
        %474 = vmatprep.subr.bf16.mxu0 0
        %475 = vmatpush1.bf16.msra.mxu0 0
        %476 = vmatprep.subr.bf16.mxu0 0
        %477 = vmatpush1.bf16.msra.mxu0 0
        %478 = vmatprep.subr.bf16.mxu0 0
        %479 = vmatpush1.bf16.msra.mxu0 0
        %480 = vmatprep.mubr.bf16.mxu0 0
        %481 = vmatmul.mubr.bf16.gmra.mrb[0].mxu0 %v294
        %v482 = vpop.f32.mrb[0].mxu0
        %v483 = vadd.f32 0.0, %v482
        %v484 = vpop.f32.mrb[0].mxu0
        %v485 = vpop.f32.mrb[0].mxu0
        %v486 = vpop.f32.mrb[0].mxu0
        %487 = vdwg.mxu0
        %v489 = vcombine.high %v379, %v379
        %v491 = vpack.c.bf16 %v379, %v379
        %v492 = vpack.c.bf16 %v489, %v489
        %v494 = vcombine.high %v483, %v483
        %v496 = vpack.c.bf16 %v483, %v483
        %v497 = vpack.c.bf16 %v494, %v494
        %498 = vmatprep.subr.bf16.mxu0 0
        %499 = vmatpush1.bf16.xpose.msra.mxu0 %v496
        %500 = vmatprep.subr.bf16.mxu0 0
        %501 = vmatpush1.bf16.xpose.msra.mxu0 0
        %502 = vmatprep.subr.bf16.mxu0 0
        %503 = vmatpush1.bf16.xpose.msra.mxu0 0
        %504 = vmatprep.subr.bf16.mxu0 0
        %505 = vmatpush1.bf16.xpose.msra.mxu0 0
        %506 = vmatprep.subr.bf16.mxu0 0
        %507 = vmatpush1.bf16.xpose.msra.mxu0 0
        %508 = vmatprep.subr.bf16.mxu0 0
        %509 = vmatpush1.bf16.xpose.msra.mxu0 0
        %510 = vmatprep.subr.bf16.mxu0 0
        %511 = vmatpush1.bf16.xpose.msra.mxu0 0
        %512 = vmatprep.subr.bf16.mxu0 0
        %513 = vmatpush1.bf16.xpose.msra.mxu0 0
        %514 = vmatprep.subr.bf16.mxu0 0
        %515 = vmatpush1.bf16.xpose.msra.mxu0 0
        %516 = vmatprep.subr.bf16.mxu0 0
        %517 = vmatpush1.bf16.xpose.msra.mxu0 0
        %518 = vmatprep.subr.bf16.mxu0 0
        %519 = vmatpush1.bf16.xpose.msra.mxu0 0
        %520 = vmatprep.subr.bf16.mxu0 0
        %521 = vmatpush1.bf16.xpose.msra.mxu0 0
        %522 = vmatprep.subr.bf16.mxu0 0
        %523 = vmatpush1.bf16.xpose.msra.mxu0 0
        %524 = vmatprep.subr.bf16.mxu0 0
        %525 = vmatpush1.bf16.xpose.msra.mxu0 0
        %526 = vmatprep.subr.bf16.mxu0 0
        %527 = vmatpush1.bf16.xpose.msra.mxu0 0
        %528 = vmatprep.subr.bf16.mxu0 0
        %529 = vmatpush1.bf16.xpose.msra.mxu0 0
        %530 = vmatprep.mubr.bf16.mxu0 0
        %531 = vmatmul.mubr.bf16.gmra.mrb[0].mxu0 %v491
        %v532 = vpop.f32.mrb[0].mxu0
        %v533 = vadd.f32 0.0, %v532
        %v534 = vpop.f32.mrb[0].mxu0
        %v535 = vpop.f32.mrb[0].mxu0
        %v536 = vpop.f32.mrb[0].mxu0
        %537 = vdwg.mxu0
        %538 = vmatprep.subr.bf16.mxu0 0
        %539 = vmatpush1.bf16.xpose.msra.mxu0 %v497
        %540 = vmatprep.subr.bf16.mxu0 0
        %541 = vmatpush1.bf16.xpose.msra.mxu0 0
        %542 = vmatprep.subr.bf16.mxu0 0
        %543 = vmatpush1.bf16.xpose.msra.mxu0 0
        %544 = vmatprep.subr.bf16.mxu0 0
        %545 = vmatpush1.bf16.xpose.msra.mxu0 0
        %546 = vmatprep.subr.bf16.mxu0 0
        %547 = vmatpush1.bf16.xpose.msra.mxu0 0
        %548 = vmatprep.subr.bf16.mxu0 0
        %549 = vmatpush1.bf16.xpose.msra.mxu0 0
        %550 = vmatprep.subr.bf16.mxu0 0
        %551 = vmatpush1.bf16.xpose.msra.mxu0 0
        %552 = vmatprep.subr.bf16.mxu0 0
        %553 = vmatpush1.bf16.xpose.msra.mxu0 0
        %554 = vmatprep.subr.bf16.mxu0 0
        %555 = vmatpush1.bf16.xpose.msra.mxu0 0
        %556 = vmatprep.subr.bf16.mxu0 0
        %557 = vmatpush1.bf16.xpose.msra.mxu0 0
        %558 = vmatprep.subr.bf16.mxu0 0
        %559 = vmatpush1.bf16.xpose.msra.mxu0 0
        %560 = vmatprep.subr.bf16.mxu0 0
        %561 = vmatpush1.bf16.xpose.msra.mxu0 0
        %562 = vmatprep.subr.bf16.mxu0 0
        %563 = vmatpush1.bf16.xpose.msra.mxu0 0
        %564 = vmatprep.subr.bf16.mxu0 0
        %565 = vmatpush1.bf16.xpose.msra.mxu0 0
        %566 = vmatprep.subr.bf16.mxu0 0
        %567 = vmatpush1.bf16.xpose.msra.mxu0 0
        %568 = vmatprep.subr.bf16.mxu0 0
        %569 = vmatpush1.bf16.xpose.msra.mxu0 0
        %570 = vmatprep.mubr.bf16.mxu0 0
        %571 = vmatmul.mubr.bf16.gmra.mrb[0].mxu0 %v492
        %v572 = vpop.f32.mrb[0].mxu0
        %v573 = vadd.f32 0.0, %v572
        %v574 = vpop.f32.mrb[0].mxu0
        %v575 = vpop.f32.mrb[0].mxu0
        %v576 = vpop.f32.mrb[0].mxu0
        %577 = vdwg.mxu0
        %v578 = vmul.f32 %v533, 0.088388346
        %v579 = vmul.f32 %v573, 0.088388346
        %v580 = vadd.f32 %v578, %v266
        %v581 = vadd.f32 %v579, %v267
        %vm582 = vcmask 27648
        %v583 = vsel %vm582, %v580, -inf
        %584 = vmax.xlane.f32.xlu0 %v583
        %v585 = vpop.xlane.xlu0 %584
        %v586 = vsel %vm582, %v581, -inf
        %587 = vmax.xlane.f32.xlu0 %v586
        %v588 = vpop.xlane.xlu0 %587
        %v589 = vsub.f32 %v580, %v585
        %v590 = vsub.f32 %v581, %v588
        %v591 = vmul.f32 %v589, 1.442695
        %v592 = vpow.pop %v591
        %v593 = vmul.f32 %v590, 1.442695
        %v594 = vpow.pop %v593
        %v595 = vsel %vm582, %v592, 0.0
        %596 = vadd.xlane.f32.xlu0 %v595
        %v597 = vpop.xlane.xlu0 %596
        %v598 = vsel %vm582, %v594, 0.0
        %599 = vadd.xlane.f32.xlu0 %v598
        %v600 = vpop.xlane.xlu0 %599
        %v601 = vrcp.pop %v597
        %v602 = vrcp.pop %v600
        %v603 = vmul.f32 %v592, %v601
        %v604 = vmul.f32 %v594, %v602
        %v605 = vpack.c.bf16 %v603, %v603
        %v606 = vpack.c.bf16 %v604, %v604
        %vm607 = vcmask 31744
        %v609 = vsel %vm607, %v605, 0
        %vm611 = vcmask 1041408
        %v613 = vsel %vm611, %v264, 0
        %615 = vmatprep.subr.bf16.mxu0 0
        %616 = vmatpush1.bf16.msra.mxu0 %v613
        %617 = vmatprep.subr.bf16.mxu0 0
        %618 = vmatpush1.bf16.msra.mxu0 0
        %619 = vmatprep.subr.bf16.mxu0 0
        %620 = vmatpush1.bf16.msra.mxu0 0
        %621 = vmatprep.subr.bf16.mxu0 0
        %622 = vmatpush1.bf16.msra.mxu0 0
        %623 = vmatprep.subr.bf16.mxu0 0
        %624 = vmatpush1.bf16.msra.mxu0 0
        %625 = vmatprep.subr.bf16.mxu0 0
        %626 = vmatpush1.bf16.msra.mxu0 0
        %627 = vmatprep.subr.bf16.mxu0 0
        %628 = vmatpush1.bf16.msra.mxu0 0
        %629 = vmatprep.subr.bf16.mxu0 0
        %630 = vmatpush1.bf16.msra.mxu0 0
        %631 = vmatprep.subr.bf16.mxu0 0
        %632 = vmatpush1.bf16.msra.mxu0 0
        %633 = vmatprep.subr.bf16.mxu0 0
        %634 = vmatpush1.bf16.msra.mxu0 0
        %635 = vmatprep.subr.bf16.mxu0 0
        %636 = vmatpush1.bf16.msra.mxu0 0
        %637 = vmatprep.subr.bf16.mxu0 0
        %638 = vmatpush1.bf16.msra.mxu0 0
        %639 = vmatprep.subr.bf16.mxu0 0
        %640 = vmatpush1.bf16.msra.mxu0 0
        %641 = vmatprep.subr.bf16.mxu0 0
        %642 = vmatpush1.bf16.msra.mxu0 0
        %643 = vmatprep.subr.bf16.mxu0 0
        %644 = vmatpush1.bf16.msra.mxu0 0
        %645 = vmatprep.subr.bf16.mxu0 0
        %646 = vmatpush1.bf16.msra.mxu0 0
        %647 = vmatprep.mubr.bf16.mxu0 0
        %648 = vmatmul.mubr.bf16.gmra.mrb[0].mxu0 %v609
        %v649 = vpop.f32.mrb[0].mxu0
        %v650 = vadd.f32 0.0, %v649
        %v651 = vpop.f32.mrb[0].mxu0
        %v652 = vpop.f32.mrb[0].mxu0
        %v653 = vpop.f32.mrb[0].mxu0
        %654 = vdwg.mxu0
        %v656 = vsel %vm607, %v606, 0
        %v659 = vsel %vm611, %v265, 0
        %661 = vmatprep.subr.bf16.mxu0 0
        %662 = vmatpush1.bf16.msra.mxu0 %v659
        %663 = vmatprep.subr.bf16.mxu0 0
        %664 = vmatpush1.bf16.msra.mxu0 0
        %665 = vmatprep.subr.bf16.mxu0 0
        %666 = vmatpush1.bf16.msra.mxu0 0
        %667 = vmatprep.subr.bf16.mxu0 0
        %668 = vmatpush1.bf16.msra.mxu0 0
        %669 = vmatprep.subr.bf16.mxu0 0
        %670 = vmatpush1.bf16.msra.mxu0 0
        %671 = vmatprep.subr.bf16.mxu0 0
        %672 = vmatpush1.bf16.msra.mxu0 0
        %673 = vmatprep.subr.bf16.mxu0 0
        %674 = vmatpush1.bf16.msra.mxu0 0
        %675 = vmatprep.subr.bf16.mxu0 0
        %676 = vmatpush1.bf16.msra.mxu0 0
        %677 = vmatprep.subr.bf16.mxu0 0
        %678 = vmatpush1.bf16.msra.mxu0 0
        %679 = vmatprep.subr.bf16.mxu0 0
        %680 = vmatpush1.bf16.msra.mxu0 0
        %681 = vmatprep.subr.bf16.mxu0 0
        %682 = vmatpush1.bf16.msra.mxu0 0
        %683 = vmatprep.subr.bf16.mxu0 0
        %684 = vmatpush1.bf16.msra.mxu0 0
        %685 = vmatprep.subr.bf16.mxu0 0
        %686 = vmatpush1.bf16.msra.mxu0 0
        %687 = vmatprep.subr.bf16.mxu0 0
        %688 = vmatpush1.bf16.msra.mxu0 0
        %689 = vmatprep.subr.bf16.mxu0 0
        %690 = vmatpush1.bf16.msra.mxu0 0
        %691 = vmatprep.subr.bf16.mxu0 0
        %692 = vmatpush1.bf16.msra.mxu0 0
        %693 = vmatprep.mubr.bf16.mxu0 0
        %694 = vmatmul.mubr.bf16.gmra.mrb[0].mxu0 %v656
        %v695 = vpop.f32.mrb[0].mxu0
        %v696 = vadd.f32 0.0, %v695
        %v697 = vpop.f32.mrb[0].mxu0
        %v698 = vpop.f32.mrb[0].mxu0
        %v699 = vpop.f32.mrb[0].mxu0
        %700 = vdwg.mxu0
        %v701 = vpack.c.bf16 %v650, %v650
        %v702 = vpack.c.bf16 %v696, %v696
        %v705 = vunpack.c.l.b16 %v701
        %v706 = vunpack.c.l.b16 %v702
        %v707 = vrot.slane %v706, 7
        %vm708 = vcmask 1041409
        %v709 = vsel %vm708, %v707, %v705
        %v710 = vpack.c.b16 %v709, %v709
        %712 = vmatprep.subr.bf16.mxu0 0
        %713 = vmatpush1.bf16.xpose.msra.mxu0 %v268
        %714 = vmatprep.subr.bf16.mxu0 0
        %715 = vmatpush1.bf16.xpose.msra.mxu0 0
        %716 = vmatprep.subr.bf16.mxu0 0
        %717 = vmatpush1.bf16.xpose.msra.mxu0 0
        %718 = vmatprep.subr.bf16.mxu0 0
        %719 = vmatpush1.bf16.xpose.msra.mxu0 0
        %720 = vmatprep.subr.bf16.mxu0 0
        %721 = vmatpush1.bf16.xpose.msra.mxu0 0
        %722 = vmatprep.subr.bf16.mxu0 0
        %723 = vmatpush1.bf16.xpose.msra.mxu0 0
        %724 = vmatprep.subr.bf16.mxu0 0
        %725 = vmatpush1.bf16.xpose.msra.mxu0 0
        %726 = vmatprep.subr.bf16.mxu0 0
        %727 = vmatpush1.bf16.xpose.msra.mxu0 0
        %728 = vmatprep.subr.bf16.mxu0 0
        %729 = vmatpush1.bf16.xpose.msra.mxu0 0
        %730 = vmatprep.subr.bf16.mxu0 0
        %731 = vmatpush1.bf16.xpose.msra.mxu0 0
        %732 = vmatprep.subr.bf16.mxu0 0
        %733 = vmatpush1.bf16.xpose.msra.mxu0 0
        %734 = vmatprep.subr.bf16.mxu0 0
        %735 = vmatpush1.bf16.xpose.msra.mxu0 0
        %736 = vmatprep.subr.bf16.mxu0 0
        %737 = vmatpush1.bf16.xpose.msra.mxu0 0
        %738 = vmatprep.subr.bf16.mxu0 0
        %739 = vmatpush1.bf16.xpose.msra.mxu0 0
        %740 = vmatprep.subr.bf16.mxu0 0
        %741 = vmatpush1.bf16.xpose.msra.mxu0 0
        %742 = vmatprep.subr.bf16.mxu0 0
        %743 = vmatpush1.bf16.xpose.msra.mxu0 0
        %744 = vmatprep.mubr.bf16.mxu0 0
        %745 = vmatmul.mubr.bf16.gmra.mrb[0].mxu0 %v710
        %v746 = vpop.f32.mrb[0].mxu0
        %v747 = vadd.f32 0.0, %v746
        %v748 = vpop.f32.mrb[0].mxu0
        %v749 = vpop.f32.mrb[0].mxu0
        %v750 = vpop.f32.mrb[0].mxu0
        %751 = vdwg.mxu0
        %vm752 = vcmask 25600
        %v753 = vsel %vm752, %v747, -inf
        %754 = vmax.xlane.f32.xlu0 %v753
        %v755 = vpop.xlane.xlu0 %754
        %v756 = vsub.f32 %v747, %v755
        %v757 = vmul.f32 %v756, 1.442695
        %v758 = vpow.pop %v757
        %v759 = vsel %vm752, %v758, 0.0
        %760 = vadd.xlane.f32.xlu0 %v759
        %v761 = vpop.xlane.xlu0 %760
        %v762 = vrcp.pop %v761
        %v763 = vmul.f32 %v758, %v762
        %v764 = vpack.c.bf16 %v763, %v763
        %v766 = vsel %vm607, %v764, 0
        %v769 = vsel %vm611, %v268, 0
        %771 = vmatprep.subr.bf16.mxu0 0
        %772 = vmatpush1.bf16.msra.mxu0 %v769
        %773 = vmatprep.subr.bf16.mxu0 0
        %774 = vmatpush1.bf16.msra.mxu0 0
        %775 = vmatprep.subr.bf16.mxu0 0
        %776 = vmatpush1.bf16.msra.mxu0 0
        %777 = vmatprep.subr.bf16.mxu0 0
        %778 = vmatpush1.bf16.msra.mxu0 0
        %779 = vmatprep.subr.bf16.mxu0 0
        %780 = vmatpush1.bf16.msra.mxu0 0
        %781 = vmatprep.subr.bf16.mxu0 0
        %782 = vmatpush1.bf16.msra.mxu0 0
        %783 = vmatprep.subr.bf16.mxu0 0
        %784 = vmatpush1.bf16.msra.mxu0 0
        %785 = vmatprep.subr.bf16.mxu0 0
        %786 = vmatpush1.bf16.msra.mxu0 0
        %787 = vmatprep.subr.bf16.mxu0 0
        %788 = vmatpush1.bf16.msra.mxu0 0
        %789 = vmatprep.subr.bf16.mxu0 0
        %790 = vmatpush1.bf16.msra.mxu0 0
        %791 = vmatprep.subr.bf16.mxu0 0
        %792 = vmatpush1.bf16.msra.mxu0 0
        %793 = vmatprep.subr.bf16.mxu0 0
        %794 = vmatpush1.bf16.msra.mxu0 0
        %795 = vmatprep.subr.bf16.mxu0 0
        %796 = vmatpush1.bf16.msra.mxu0 0
        %797 = vmatprep.subr.bf16.mxu0 0
        %798 = vmatpush1.bf16.msra.mxu0 0
        %799 = vmatprep.subr.bf16.mxu0 0
        %800 = vmatpush1.bf16.msra.mxu0 0
        %801 = vmatprep.subr.bf16.mxu0 0
        %802 = vmatpush1.bf16.msra.mxu0 0
        %803 = vmatprep.mubr.bf16.mxu0 0
        %804 = vmatmul.mubr.bf16.gmra.mrb[0].mxu0 %v766
        %v805 = vpop.f32.mrb[0].mxu0
        %v806 = vadd.f32 0.0, %v805
        %v807 = vpop.f32.mrb[0].mxu0
        %v808 = vpop.f32.mrb[0].mxu0
        %v809 = vpop.f32.mrb[0].mxu0
        %810 = vdwg.mxu0
        %v813 = vrot.slane %v696, 7
        %v814 = vsel %vm708, %v813, %v650
        %v816 = vmul.f32 %v806, %v814
        %v817 = vsel %vm611, %v816, 0.0
        %818 = vadd.xlane.f32.xlu0 %v817
        %v819 = vpop.xlane.xlu0 %818
        %v821 = vlaneseq
        %v822 = vand.u32 %v821, 127
        %v823 = vlaneseq
        %v824 = vshrl.u32 %v823, 7
        %v825 = vsub.s32 %v822, %v824
        %v826 = vrot.slane %v819, %v825
        %vm828 = vcmask 8192
        %829 = vst.msk [vmem:[%s246] sm:$0x1] %vm828, %v826
        %s830 = sand.u32 %s147, 1
        %s831 = scalar_lea.sflag [#allocation3], %s830
        %s832 = sand.u32 %s147, 1
        %s833 = scalar_lea.vmem [#allocation2], %s832
        // Predicated region
        $region41: #{model_forward.3} parent=39 // pred_check
          %p834 = pneg %p157
        $region42: #{model_forward.3} parent=39 // pred_check_branch
          %836 = sbr.rel (%p834) target = $region44
        $region43: #{model_forward.3} parent=39 // pred_region
          %s838 = ssub.s32 16, 16
          %839 = vsyncadd %s831, %s838
          %s840 = smul.addr %s19, 16
          %s841 = scalar_lea.hbm %s5, %s840
          %s843 = sshll.u32 %s833, 4
          %s844 = int_to_ptr.vmem [resolvable:$true] %s843
          %846 = dma.vmem_to_hbm [thread:$0]  %s844, 16, %s841, %s831
        $region44: #{model_forward.3} parent=39 // pred_fallthru
          _
      $region40: #{model_forward.3} parent=5 // pred_fallthru
        _
      %p847 = scmp.le.s32.totalorder 2, %s14
      // Predicated region
      $region45: #{model_forward.3} parent=5 // pred_check
        %p848 = pneg %p847
      $region46: #{model_forward.3} parent=5 // pred_check_branch
        %850 = sbr.rel (%p848) target = $region48
      $region47: #{model_forward.3} parent=5 // pred_region
        %s851 = ssub.s32 %s14, 2
        // Predicated region
        $region49: #{model_forward.3} parent=47 // pred_check
          %p852 = pneg %p163
        $region50: #{model_forward.3} parent=47 // pred_check_branch
          %854 = sbr.rel (%p852) target = $region52
        $region51: #{model_forward.3} parent=47 // pred_region
          %s855 = sand.u32 %s148, 1
          %s856 = scalar_lea.sflag [#allocation3], %s855
          %s857 = sand.u32 %s148, 1
          %s858 = scalar_lea.vmem [#allocation2], %s857
          %859 = dma.done %s856, 16
        $region52: #{model_forward.3} parent=47 // pred_fallthru
          _
      $region48: #{model_forward.3} parent=5 // pred_fallthru
        _
    $region6: #{model_forward.3} parent=1 // loop_footer
      %s18 = sadd.s32 1, %s14
    $region7: #{model_forward.3} parent=1 // loop_footer_branch
      %13 = sbr.rel target = $region3
    $region8: #{model_forward.3} parent=1 // loop_exit
      _
    %860 = vsyncpa [#allocation3], 1
    %s861 = scalar_lea.sflag [#allocation3], 1
    %862 = vsyncpa %s861, 1

// kernel: model_forward.2
$region0: #{model_forward.2}
  #allocation0 [shape = 'u32[]', space=smem, size = 0x4, offset = 0x4, fixed_abs, tag = 'smem constant byte address 0x4 - core index']
  #allocation1 [shape = 'u32[144,128]{1,0:T(1,128)}', space=vmem, size = 0x12000, scoped, tag = 'internal scratch']
  %s0 = inlined_call_operand.vmem [shape: bf16[32,8,96], index: 0, kind: input, shape index: {}]
  %s1 = inlined_call_operand.vmem [shape: f32[32,8], index: 1, kind: input, shape index: {}]
  %s2 = inlined_call_operand.vmem [shape: bf16[96,128], index: 2, kind: input, shape index: {}]
  %s3 = inlined_call_operand.vmem [shape: f32[1,128], index: 3, kind: input, shape index: {}]
  %s4 = inlined_call_operand.vmem [shape: bf16[128,64], index: 4, kind: input, shape index: {}]
  %s5 = inlined_call_operand.vmem [shape: f32[1,64], index: 5, kind: input, shape index: {}]
  %s6 = inlined_call_operand.vmem [shape: bf16[32,128], index: 6, kind: output, shape index: {}]
  %s7 = sld [smem:[#allocation0]]
  $region57: #{model_forward.2} parent=0
    _
  %s9 = ssub.s32 1, %s7
  %s10 = scalar_select 0, %s9, %s7
  loop: start=0, step=1, limit=4
  $region2: #{model_forward.2} parent=0 // loop_pre_header
    _
  $region3: #{model_forward.2} parent=0 // loop_header
    %s12 = sphi 0, %s16
    %p13 = scmp.ge.s32.totalorder %s12, 4
    %s22 = sphi 0, %s24
    %s25 = sphi 0, %s22
    %s26 = sphi 0, %s25
    %s42 = sphi 0, %s26
    %s48 = sphi 0, %s50
    %s51 = sphi 0, %s48
    %s52 = sphi 0, %s51
    %s68 = sphi 0, %s52
    %s72 = sphi 0, %s72
    %s74 = sphi 0, %s72
    %s75 = sphi 0, %s74
    %s89 = sphi 0, %s75
    %s93 = sphi 0, %s93
    %s95 = sphi 0, %s93
    %s96 = sphi 0, %s95
    %s110 = sphi 0, %s96
    %s114 = sphi 0, %s114
    %s116 = sphi 0, %s114
    %s117 = sphi 0, %s116
    %s131 = sphi 0, %s117
    %s135 = sphi 0, %s135
    %s137 = sphi 0, %s135
    %s138 = sphi 0, %s137
    %s152 = sphi 0, %s138
    %s158 = sphi 0, %s160
    %s161 = sphi 0, %s158
    %s162 = sphi 0, %s161
    %s178 = sphi 0, %s162
  $region4: #{model_forward.2} parent=0 // loop_header_branch
    %15 = sbr.rel (%p13) target = $region8
  $region5: #{model_forward.2} parent=0 // loop_body
    %s17 = ssub.s32 %s12, 1
    %s18 = ssub.s32 %s12, 2
    %s19 = sadd.s32 %s12, 1
    %s20 = ssub.s32 %s12, %s19
    %p21 = scmp.eq.s32.totalorder %s20, 0
    %s23 = sadd.s32 %s22, 1
    %s24 = scalar_select %p21, %s22, %s23
    %p27 = pneg %p21
    %p28 = scmp.eq.s32.totalorder %s12, 1
    %p29 = por %p27, %p28
    %p30 = scmp.ne.s32.totalorder %s22, %s25
    %p31 = scmp.eq.s32.totalorder %s12, 0
    %p32 = por %p30, %p31
    %p33 = scmp.ne.s32.totalorder %s22, %s25
    %p34 = scmp.eq.s32.totalorder %s17, 1
    %p35 = por %p33, %p34
    %p36 = scmp.ne.s32.totalorder %s25, %s26
    %p37 = scmp.eq.s32.totalorder %s17, 0
    %p38 = por %p36, %p37
    %p39 = scmp.ne.s32.totalorder %s25, %s26
    %p40 = scmp.eq.s32.totalorder %s18, 1
    %p41 = por %p39, %p40
    %p43 = scmp.ne.s32.totalorder %s26, %s42
    %p44 = scmp.eq.s32.totalorder %s18, 0
    %p45 = por %p43, %p44
    %s46 = ssub.s32 %s12, %s19
    %p47 = scmp.eq.s32.totalorder %s46, 0
    %s49 = sadd.s32 %s48, 1
    %s50 = scalar_select %p47, %s48, %s49
    %p53 = pneg %p47
    %p54 = scmp.eq.s32.totalorder %s12, 1
    %p55 = por %p53, %p54
    %p56 = scmp.ne.s32.totalorder %s48, %s51
    %p57 = scmp.eq.s32.totalorder %s12, 0
    %p58 = por %p56, %p57
    %p59 = scmp.ne.s32.totalorder %s48, %s51
    %p60 = scmp.eq.s32.totalorder %s17, 1
    %p61 = por %p59, %p60
    %p62 = scmp.ne.s32.totalorder %s51, %s52
    %p63 = scmp.eq.s32.totalorder %s17, 0
    %p64 = por %p62, %p63
    %p65 = scmp.ne.s32.totalorder %s51, %s52
    %p66 = scmp.eq.s32.totalorder %s18, 1
    %p67 = por %p65, %p66
    %p69 = scmp.ne.s32.totalorder %s52, %s68
    %p70 = scmp.eq.s32.totalorder %s18, 0
    %p71 = por %p69, %p70
    %s73 = sadd.s32 %s72, 1
    %p76 = scmp.eq.s32.totalorder %s12, 1
    %p77 = scmp.ne.s32.totalorder %s72, %s74
    %p78 = scmp.eq.s32.totalorder %s12, 0
    %p79 = por %p77, %p78
    %p80 = scmp.ne.s32.totalorder %s72, %s74
    %p81 = scmp.eq.s32.totalorder %s17, 1
    %p82 = por %p80, %p81
    %p83 = scmp.ne.s32.totalorder %s74, %s75
    %p84 = scmp.eq.s32.totalorder %s17, 0
    %p85 = por %p83, %p84
    %p86 = scmp.ne.s32.totalorder %s74, %s75
    %p87 = scmp.eq.s32.totalorder %s18, 1
    %p88 = por %p86, %p87
    %p90 = scmp.ne.s32.totalorder %s75, %s89
    %p91 = scmp.eq.s32.totalorder %s18, 0
    %p92 = por %p90, %p91
    %s94 = sadd.s32 %s93, 1
    %p97 = scmp.eq.s32.totalorder %s12, 1
    %p98 = scmp.ne.s32.totalorder %s93, %s95
    %p99 = scmp.eq.s32.totalorder %s12, 0
    %p100 = por %p98, %p99
    %p101 = scmp.ne.s32.totalorder %s93, %s95
    %p102 = scmp.eq.s32.totalorder %s17, 1
    %p103 = por %p101, %p102
    %p104 = scmp.ne.s32.totalorder %s95, %s96
    %p105 = scmp.eq.s32.totalorder %s17, 0
    %p106 = por %p104, %p105
    %p107 = scmp.ne.s32.totalorder %s95, %s96
    %p108 = scmp.eq.s32.totalorder %s18, 1
    %p109 = por %p107, %p108
    %p111 = scmp.ne.s32.totalorder %s96, %s110
    %p112 = scmp.eq.s32.totalorder %s18, 0
    %p113 = por %p111, %p112
    %s115 = sadd.s32 %s114, 1
    %p118 = scmp.eq.s32.totalorder %s12, 1
    %p119 = scmp.ne.s32.totalorder %s114, %s116
    %p120 = scmp.eq.s32.totalorder %s12, 0
    %p121 = por %p119, %p120
    %p122 = scmp.ne.s32.totalorder %s114, %s116
    %p123 = scmp.eq.s32.totalorder %s17, 1
    %p124 = por %p122, %p123
    %p125 = scmp.ne.s32.totalorder %s116, %s117
    %p126 = scmp.eq.s32.totalorder %s17, 0
    %p127 = por %p125, %p126
    %p128 = scmp.ne.s32.totalorder %s116, %s117
    %p129 = scmp.eq.s32.totalorder %s18, 1
    %p130 = por %p128, %p129
    %p132 = scmp.ne.s32.totalorder %s117, %s131
    %p133 = scmp.eq.s32.totalorder %s18, 0
    %p134 = por %p132, %p133
    %s136 = sadd.s32 %s135, 1
    %p139 = scmp.eq.s32.totalorder %s12, 1
    %p140 = scmp.ne.s32.totalorder %s135, %s137
    %p141 = scmp.eq.s32.totalorder %s12, 0
    %p142 = por %p140, %p141
    %p143 = scmp.ne.s32.totalorder %s135, %s137
    %p144 = scmp.eq.s32.totalorder %s17, 1
    %p145 = por %p143, %p144
    %p146 = scmp.ne.s32.totalorder %s137, %s138
    %p147 = scmp.eq.s32.totalorder %s17, 0
    %p148 = por %p146, %p147
    %p149 = scmp.ne.s32.totalorder %s137, %s138
    %p150 = scmp.eq.s32.totalorder %s18, 1
    %p151 = por %p149, %p150
    %p153 = scmp.ne.s32.totalorder %s138, %s152
    %p154 = scmp.eq.s32.totalorder %s18, 0
    %p155 = por %p153, %p154
    %s156 = ssub.s32 %s12, %s19
    %p157 = scmp.eq.s32.totalorder %s156, 0
    %s159 = sadd.s32 %s158, 1
    %s160 = scalar_select %p157, %s158, %s159
    %p163 = pneg %p157
    %p164 = scmp.eq.s32.totalorder %s12, 1
    %p165 = por %p163, %p164
    %p166 = scmp.ne.s32.totalorder %s158, %s161
    %p167 = scmp.eq.s32.totalorder %s12, 0
    %p168 = por %p166, %p167
    %p169 = scmp.ne.s32.totalorder %s158, %s161
    %p170 = scmp.eq.s32.totalorder %s17, 1
    %p171 = por %p169, %p170
    %p172 = scmp.ne.s32.totalorder %s161, %s162
    %p173 = scmp.eq.s32.totalorder %s17, 0
    %p174 = por %p172, %p173
    %p175 = scmp.ne.s32.totalorder %s161, %s162
    %p176 = scmp.eq.s32.totalorder %s18, 1
    %p177 = por %p175, %p176
    %p179 = scmp.ne.s32.totalorder %s162, %s178
    %p180 = scmp.eq.s32.totalorder %s18, 0
    %p181 = por %p179, %p180
    %p182 = scmp.le.s32.totalorder 1, %s12
    %p183 = scmp.lt.s32.totalorder %s12, 3
    %p184 = pnand %p182, %p183
    %p185 = pneg %p184
    // Predicated region
    $region9: #{model_forward.2} parent=5 // pred_check
      _
    $region10: #{model_forward.2} parent=5 // pred_check_branch
      %187 = sbr.rel (%p184) target = $region12
    $region11: #{model_forward.2} parent=5 // pred_region
      %s188 = ssub.s32 %s12, 1
      // Predicated region
      $region13: #{model_forward.2} parent=11 // pred_check
        %p189 = pneg %p85
      $region14: #{model_forward.2} parent=11 // pred_check_branch
        %191 = sbr.rel (%p189) target = $region16
      $region15: #{model_forward.2} parent=11 // pred_region
        _
      $region16: #{model_forward.2} parent=11 // pred_fallthru
        _
      // Predicated region
      $region17: #{model_forward.2} parent=11 // pred_check
        %p192 = pneg %p106
      $region18: #{model_forward.2} parent=11 // pred_check_branch
        %194 = sbr.rel (%p192) target = $region20
      $region19: #{model_forward.2} parent=11 // pred_region
        _
      $region20: #{model_forward.2} parent=11 // pred_fallthru
        _
      // Predicated region
      $region21: #{model_forward.2} parent=11 // pred_check
        %p195 = pneg %p127
      $region22: #{model_forward.2} parent=11 // pred_check_branch
        %197 = sbr.rel (%p195) target = $region24
      $region23: #{model_forward.2} parent=11 // pred_region
        _
      $region24: #{model_forward.2} parent=11 // pred_fallthru
        _
      // Predicated region
      $region25: #{model_forward.2} parent=11 // pred_check
        %p198 = pneg %p148
      $region26: #{model_forward.2} parent=11 // pred_check_branch
        %200 = sbr.rel (%p198) target = $region28
      $region27: #{model_forward.2} parent=11 // pred_region
        _
      $region28: #{model_forward.2} parent=11 // pred_fallthru
        _
    $region12: #{model_forward.2} parent=5 // pred_fallthru
      _
    %p201 = scmp.lt.s32.totalorder %s12, 2
    // Predicated region
    $region29: #{model_forward.2} parent=5 // pred_check
      %p202 = pneg %p201
    $region30: #{model_forward.2} parent=5 // pred_check_branch
      %204 = sbr.rel (%p202) target = $region32
    $region31: #{model_forward.2} parent=5 // pred_region
      // Predicated region
      $region33: #{model_forward.2} parent=31 // pred_check
        %p205 = pneg %p32
      $region34: #{model_forward.2} parent=31 // pred_check_branch
        %207 = sbr.rel (%p205) target = $region36
      $region35: #{model_forward.2} parent=31 // pred_region
        %s208 = smul.u32 16, %s12
        %p209 = scmp.lt.s32.totalorder %s208, 31
        %s210 = scalar_select %p209, %s208, 31
        %s211 = smul.addr %s210, 4
        %s212 = scalar_lea.vmem %s0, %s211
        %s213 = smul.u32 16, %s12
      $region36: #{model_forward.2} parent=31 // pred_fallthru
        _
      // Predicated region
      $region37: #{model_forward.2} parent=31 // pred_check
        %p214 = pneg %p58
      $region38: #{model_forward.2} parent=31 // pred_check_branch
        %216 = sbr.rel (%p214) target = $region40
      $region39: #{model_forward.2} parent=31 // pred_region
        %s217 = smul.u32 2, %s12
        %p218 = scmp.lt.s32.totalorder %s217, 3
        %s219 = scalar_select %p218, %s217, 3
        %s220 = smul.addr %s219, 8
        %s221 = scalar_lea.vmem %s1, %s220
        %s222 = smul.u32 2, %s12
      $region40: #{model_forward.2} parent=31 // pred_fallthru
        _
    $region32: #{model_forward.2} parent=5 // pred_fallthru
      _
    %p223 = scmp.le.s32.totalorder 1, %s12
    %p224 = scmp.lt.s32.totalorder %s12, 3
    %p225 = pnand %p223, %p224
    %p226 = pneg %p225
    // Predicated region
    $region41: #{model_forward.2} parent=5 // pred_check
      _
    $region42: #{model_forward.2} parent=5 // pred_check_branch
      %228 = sbr.rel (%p225) target = $region44
    $region43: #{model_forward.2} parent=5 // pred_region
      %s229 = ssub.s32 %s12, 1
      %s230 = smul.u32 16, %s17
      %p231 = scmp.lt.s32.totalorder %s230, 31
      %s232 = scalar_select %p231, %s230, 31
      %s233 = smul.addr %s232, 4
      %s234 = scalar_lea.vmem %s0, %s233
      %p235 = pneg %p38
      %p236 = pneg %p35
      %s237 = smul.u32 2, %s17
      %p238 = scmp.lt.s32.totalorder %s237, 3
      %s239 = scalar_select %p238, %s237, 3
      %s240 = smul.addr %s239, 8
      %s241 = scalar_lea.vmem %s1, %s240
      %p242 = pneg %p64
      %p243 = pneg %p61
      %p244 = pneg %p85
      %p245 = pneg %p82
      %p246 = pneg %p106
      %p247 = pneg %p103
      %p248 = pneg %p127
      %p249 = pneg %p124
      %p250 = pneg %p148
      %p251 = pneg %p145
      %p252 = pneg %p174
      %p253 = pneg %p171
      %s254 = smul.u32 2, %s17
      %p255 = scmp.lt.s32.totalorder %s254, 3
      %s256 = scalar_select %p255, %s254, 3
      %s257 = smul.addr %s256, 4
      %s258 = scalar_lea.vmem %s6, %s257
      %s259 = smul.u32 16, %s17
      %p260 = scmp.lt.s32.totalorder %s259, 31
      %s261 = scalar_select %p260, %s259, 31
      %s262 = smul.addr %s261, 4
      %s263 = scalar_lea.vmem %s0, %s262
      %s264 = smul.u32 16, %s17
      %s265 = smul.u32 2, %s17
      %p266 = scmp.lt.s32.totalorder %s265, 3
      %s267 = scalar_select %p266, %s265, 3
      %s268 = smul.addr %s267, 8
      %s269 = scalar_lea.vmem %s1, %s268
      %s270 = smul.u32 2, %s17
      %s271 = smul.u32 2, %s17
      %p272 = scmp.lt.s32.totalorder %s271, 3
      %s273 = scalar_select %p272, %s271, 3
      %s274 = smul.addr %s273, 4
      %s275 = scalar_lea.vmem %s6, %s274
      %s276 = smul.u32 2, %s17
      %v278 = vld [vmem:[%s263] sm:$0xf]
      %v279 = vld [vmem:[%s263 + $0x4] sm:$0xf]
      %v280 = vld [vmem:[%s263 + $0x8] sm:$0xf]
      %v281 = vld [vmem:[%s263 + $0xc] sm:$0xf]
      %v282 = vld [vmem:[%s263 + $0x10] sm:$0xf]
      %v283 = vld [vmem:[%s263 + $0x14] sm:$0xf]
      %v284 = vld [vmem:[%s263 + $0x18] sm:$0xf]
      %v285 = vld [vmem:[%s263 + $0x1c] sm:$0xf]
      %v286 = vld [vmem:[%s263 + $0x20] sm:$0xf]
      %v287 = vld [vmem:[%s263 + $0x24] sm:$0xf]
      %v288 = vld [vmem:[%s263 + $0x28] sm:$0xf]
      %v289 = vld [vmem:[%s263 + $0x2c] sm:$0xf]
      %v290 = vld [vmem:[%s263 + $0x30] sm:$0xf]
      %v291 = vld [vmem:[%s263 + $0x34] sm:$0xf]
      %v292 = vld [vmem:[%s263 + $0x38] sm:$0xf]
      %v293 = vld [vmem:[%s263 + $0x3c] sm:$0xf]
      %v294 = vld [vmem:[%s2] sm:$0xf]
      %v295 = vld [vmem:[%s2 + $0x4] sm:$0xf]
      %v296 = vld [vmem:[%s2 + $0x8] sm:$0xf]
      %v297 = vld [vmem:[%s2 + $0xc] sm:$0xf]
      %v298 = vld [vmem:[%s2 + $0x10] sm:$0xf]
      %v299 = vld [vmem:[%s2 + $0x14] sm:$0xf]
      %v300 = vld [vmem:[%s2 + $0x18] sm:$0xf]
      %v301 = vld [vmem:[%s2 + $0x1c] sm:$0xf]
      %v302 = vld [vmem:[%s2 + $0x20] sm:$0xf]
      %v303 = vld [vmem:[%s2 + $0x24] sm:$0xf]
      %v304 = vld [vmem:[%s2 + $0x28] sm:$0xf]
      %v305 = vld [vmem:[%s2 + $0x2c] sm:$0xf]
      %v306 = vld [vmem:[%s3] sm:$0x1]
      %v308 = vlaneseq
      %v309 = vshrl.u32 %v308, 7
      %v310 = vsub.s32 0, %v309
      %v311 = vrot.slane %v306, %v310
      %v329 = vunpack.c.l.b16 %v278
      %v330 = vunpack.c.l.b16 %v279
      %v331 = vunpack.c.l.b16 %v280
      %v332 = vunpack.c.l.b16 %v281
      %v333 = vunpack.c.l.b16 %v282
      %v334 = vunpack.c.l.b16 %v283
      %v335 = vunpack.c.l.b16 %v284
      %v336 = vunpack.c.l.b16 %v285
      %v337 = vunpack.c.l.b16 %v286
      %v338 = vunpack.c.l.b16 %v287
      %v339 = vunpack.c.l.b16 %v288
      %v340 = vunpack.c.l.b16 %v289
      %v341 = vunpack.c.l.b16 %v290
      %v342 = vunpack.c.l.b16 %v291
      %v343 = vunpack.c.l.b16 %v292
      %v344 = vunpack.c.l.b16 %v293
      %v345 = vpack.c.b16 %v330, %v329
      %v346 = vpack.c.b16 %v332, %v331
      %v347 = vpack.c.b16 %v334, %v333
      %v348 = vpack.c.b16 %v336, %v335
      %v349 = vpack.c.b16 %v338, %v337
      %v350 = vpack.c.b16 %v340, %v339
      %v351 = vpack.c.b16 %v342, %v341
      %v352 = vpack.c.b16 %v344, %v343
      %v365 = vunpack.c.l.b16 %v294
      %v366 = vunpack.c.l.b16 %v295
      %v367 = vunpack.c.l.b16 %v296
      %v368 = vunpack.c.l.b16 %v297
      %v369 = vunpack.c.l.b16 %v298
      %v370 = vunpack.c.l.b16 %v299
      %v371 = vunpack.c.l.b16 %v300
      %v372 = vunpack.c.l.b16 %v301
      %v373 = vunpack.c.l.b16 %v302
      %v374 = vunpack.c.l.b16 %v303
      %v375 = vunpack.c.l.b16 %v304
      %v376 = vunpack.c.l.b16 %v305
      %v377 = vpack.c.b16 %v366, %v365
      %v378 = vpack.c.b16 %v368, %v367
      %v379 = vpack.c.b16 %v370, %v369
      %v380 = vpack.c.b16 %v372, %v371
      %v381 = vpack.c.b16 %v374, %v373
      %v382 = vpack.c.b16 %v376, %v375
      %vm389 = vcmask 785408
      %v391 = vsel %vm389, %v345, 0
      %v394 = vsel %vm389, %v346, 0
      %v397 = vsel %vm389, %v347, 0
      %v400 = vsel %vm389, %v348, 0
      %v403 = vsel %vm389, %v349, 0
      %v406 = vsel %vm389, %v350, 0
      %v409 = vsel %vm389, %v351, 0
      %v412 = vsel %vm389, %v352, 0
      %414 = vmatprep.subr.bf16.mxu0 0
      %415 = vmatpush1.bf16.msra.mxu0 %v377
      %416 = vmatprep.subr.bf16.mxu0 0
      %417 = vmatpush1.bf16.msra.mxu0 %v378
      %418 = vmatprep.subr.bf16.mxu0 0
      %419 = vmatpush1.bf16.msra.mxu0 %v379
      %420 = vmatprep.subr.bf16.mxu0 0
      %421 = vmatpush1.bf16.msra.mxu0 %v380
      %422 = vmatprep.subr.bf16.mxu0 0
      %423 = vmatpush1.bf16.msra.mxu0 %v381
      %424 = vmatprep.subr.bf16.mxu0 0
      %425 = vmatpush1.bf16.msra.mxu0 %v382
      %426 = vmatprep.subr.bf16.mxu0 0
      %427 = vmatpush1.bf16.msra.mxu0 0
      %428 = vmatprep.subr.bf16.mxu0 0
      %429 = vmatpush1.bf16.msra.mxu0 0
      %430 = vmatprep.subr.bf16.mxu0 0
      %431 = vmatpush1.bf16.msra.mxu0 0
      %432 = vmatprep.subr.bf16.mxu0 0
      %433 = vmatpush1.bf16.msra.mxu0 0
      %434 = vmatprep.subr.bf16.mxu0 0
      %435 = vmatpush1.bf16.msra.mxu0 0
      %436 = vmatprep.subr.bf16.mxu0 0
      %437 = vmatpush1.bf16.msra.mxu0 0
      %438 = vmatprep.subr.bf16.mxu0 0
      %439 = vmatpush1.bf16.msra.mxu0 0
      %440 = vmatprep.subr.bf16.mxu0 0
      %441 = vmatpush1.bf16.msra.mxu0 0
      %442 = vmatprep.subr.bf16.mxu0 0
      %443 = vmatpush1.bf16.msra.mxu0 0
      %444 = vmatprep.subr.bf16.mxu0 0
      %445 = vmatpush1.bf16.msra.mxu0 0
      %446 = vmatprep.mubr.bf16.mxu0 0
      %447 = vmatmul.mubr.bf16.gmra.mrb[0].mxu0 %v391
      %v448 = vpop.f32.mrb[0].mxu0
      %v449 = vadd.f32 %v311, %v448
      %v450 = vpop.f32.mrb[0].mxu0
      %v451 = vpop.f32.mrb[0].mxu0
      %v452 = vadd.f32 %v311, %v451
      %v453 = vpop.f32.mrb[0].mxu0
      %454 = vmatprep.mubr.bf16.mxu0 0
      %455 = vmatmul.mubr.bf16.gmra.mrb[0].mxu0 %v394
      %v456 = vpop.f32.mrb[0].mxu0
      %v457 = vadd.f32 %v311, %v456
      %v458 = vpop.f32.mrb[0].mxu0
      %v459 = vpop.f32.mrb[0].mxu0
      %v460 = vadd.f32 %v311, %v459
      %v461 = vpop.f32.mrb[0].mxu0
      %462 = vmatprep.mubr.bf16.mxu0 0
      %463 = vmatmul.mubr.bf16.gmra.mrb[0].mxu0 %v397
      %v464 = vpop.f32.mrb[0].mxu0
      %v465 = vadd.f32 %v311, %v464
      %v466 = vpop.f32.mrb[0].mxu0
      %v467 = vpop.f32.mrb[0].mxu0
      %v468 = vadd.f32 %v311, %v467
      %v469 = vpop.f32.mrb[0].mxu0
      %470 = vmatprep.mubr.bf16.mxu0 0
      %471 = vmatmul.mubr.bf16.gmra.mrb[0].mxu0 %v400
      %v472 = vpop.f32.mrb[0].mxu0
      %v473 = vadd.f32 %v311, %v472
      %v474 = vpop.f32.mrb[0].mxu0
      %v475 = vpop.f32.mrb[0].mxu0
      %v476 = vadd.f32 %v311, %v475
      %v477 = vpop.f32.mrb[0].mxu0
      %478 = vmatprep.mubr.bf16.mxu0 0
      %479 = vmatmul.mubr.bf16.gmra.mrb[0].mxu0 %v403
      %v480 = vpop.f32.mrb[0].mxu0
      %v481 = vadd.f32 %v311, %v480
      %v482 = vpop.f32.mrb[0].mxu0
      %v483 = vpop.f32.mrb[0].mxu0
      %v484 = vadd.f32 %v311, %v483
      %v485 = vpop.f32.mrb[0].mxu0
      %486 = vmatprep.mubr.bf16.mxu0 0
      %487 = vmatmul.mubr.bf16.gmra.mrb[0].mxu0 %v406
      %v488 = vpop.f32.mrb[0].mxu0
      %v489 = vadd.f32 %v311, %v488
      %v490 = vpop.f32.mrb[0].mxu0
      %v491 = vpop.f32.mrb[0].mxu0
      %v492 = vadd.f32 %v311, %v491
      %v493 = vpop.f32.mrb[0].mxu0
      %494 = vmatprep.mubr.bf16.mxu0 0
      %495 = vmatmul.mubr.bf16.gmra.mrb[0].mxu0 %v409
      %v496 = vpop.f32.mrb[0].mxu0
      %v497 = vadd.f32 %v311, %v496
      %v498 = vpop.f32.mrb[0].mxu0
      %v499 = vpop.f32.mrb[0].mxu0
      %v500 = vadd.f32 %v311, %v499
      %v501 = vpop.f32.mrb[0].mxu0
      %502 = vmatprep.mubr.bf16.mxu0 0
      %503 = vmatmul.mubr.bf16.gmra.mrb[0].mxu0 %v412
      %v504 = vpop.f32.mrb[0].mxu0
      %v505 = vadd.f32 %v311, %v504
      %v506 = vpop.f32.mrb[0].mxu0
      %v507 = vpop.f32.mrb[0].mxu0
      %v508 = vadd.f32 %v311, %v507
      %v509 = vpop.f32.mrb[0].mxu0
      %510 = vdwg.mxu0
      %v511 = vmax.f32 %v449, 0.0
      %v512 = vmax.f32 %v452, 0.0
      %v513 = vmax.f32 %v457, 0.0
      %v514 = vmax.f32 %v460, 0.0
      %v515 = vmax.f32 %v465, 0.0
      %v516 = vmax.f32 %v468, 0.0
      %v517 = vmax.f32 %v473, 0.0
      %v518 = vmax.f32 %v476, 0.0
      %v519 = vmax.f32 %v481, 0.0
      %v520 = vmax.f32 %v484, 0.0
      %v521 = vmax.f32 %v489, 0.0
      %v522 = vmax.f32 %v492, 0.0
      %v523 = vmax.f32 %v497, 0.0
      %v524 = vmax.f32 %v500, 0.0
      %v525 = vmax.f32 %v505, 0.0
      %v526 = vmax.f32 %v508, 0.0
      %v527 = vpack.c.bf16 %v512, %v511
      %v528 = vpack.c.bf16 %v514, %v513
      %v529 = vpack.c.bf16 %v516, %v515
      %v530 = vpack.c.bf16 %v518, %v517
      %v531 = vpack.c.bf16 %v520, %v519
      %v532 = vpack.c.bf16 %v522, %v521
      %v533 = vpack.c.bf16 %v524, %v523
      %v534 = vpack.c.bf16 %v526, %v525
      %v535 = vld [vmem:[%s4] sm:$0xf]
      %v536 = vld [vmem:[%s4 + $0x4] sm:$0xf]
      %v537 = vld [vmem:[%s4 + $0x8] sm:$0xf]
      %v538 = vld [vmem:[%s4 + $0xc] sm:$0xf]
      %v539 = vld [vmem:[%s4 + $0x10] sm:$0xf]
      %v540 = vld [vmem:[%s4 + $0x14] sm:$0xf]
      %v541 = vld [vmem:[%s4 + $0x18] sm:$0xf]
      %v542 = vld [vmem:[%s4 + $0x1c] sm:$0xf]
      %v543 = vld [vmem:[%s4 + $0x20] sm:$0xf]
      %v544 = vld [vmem:[%s4 + $0x24] sm:$0xf]
      %v545 = vld [vmem:[%s4 + $0x28] sm:$0xf]
      %v546 = vld [vmem:[%s4 + $0x2c] sm:$0xf]
      %v547 = vld [vmem:[%s4 + $0x30] sm:$0xf]
      %v548 = vld [vmem:[%s4 + $0x34] sm:$0xf]
      %v549 = vld [vmem:[%s4 + $0x38] sm:$0xf]
      %v550 = vld [vmem:[%s4 + $0x3c] sm:$0xf]
      %v567 = vunpack.c.l.b16 %v535
      %v568 = vunpack.c.l.b16 %v536
      %v569 = vunpack.c.l.b16 %v537
      %v570 = vunpack.c.l.b16 %v538
      %v571 = vunpack.c.l.b16 %v539
      %v572 = vunpack.c.l.b16 %v540
      %v573 = vunpack.c.l.b16 %v541
      %v574 = vunpack.c.l.b16 %v542
      %v575 = vunpack.c.l.b16 %v543
      %v576 = vunpack.c.l.b16 %v544
      %v577 = vunpack.c.l.b16 %v545
      %v578 = vunpack.c.l.b16 %v546
      %v579 = vunpack.c.l.b16 %v547
      %v580 = vunpack.c.l.b16 %v548
      %v581 = vunpack.c.l.b16 %v549
      %v582 = vunpack.c.l.b16 %v550
      %v583 = vpack.c.b16 %v568, %v567
      %v584 = vpack.c.b16 %v570, %v569
      %v585 = vpack.c.b16 %v572, %v571
      %v586 = vpack.c.b16 %v574, %v573
      %v587 = vpack.c.b16 %v576, %v575
      %v588 = vpack.c.b16 %v578, %v577
      %v589 = vpack.c.b16 %v580, %v579
      %v590 = vpack.c.b16 %v582, %v581
      %599 = vmatprep.subr.bf16.mxu0 0
      %600 = vmatpush1.bf16.msra.mxu0 %v583
      %601 = vmatprep.subr.bf16.mxu0 0
      %602 = vmatpush1.bf16.msra.mxu0 %v584
      %603 = vmatprep.subr.bf16.mxu0 0
      %604 = vmatpush1.bf16.msra.mxu0 %v585
      %605 = vmatprep.subr.bf16.mxu0 0
      %606 = vmatpush1.bf16.msra.mxu0 %v586
      %607 = vmatprep.subr.bf16.mxu0 0
      %608 = vmatpush1.bf16.msra.mxu0 %v587
      %609 = vmatprep.subr.bf16.mxu0 0
      %610 = vmatpush1.bf16.msra.mxu0 %v588
      %611 = vmatprep.subr.bf16.mxu0 0
      %612 = vmatpush1.bf16.msra.mxu0 %v589
      %613 = vmatprep.subr.bf16.mxu0 0
      %614 = vmatpush1.bf16.msra.mxu0 %v590
      %615 = vmatprep.subr.bf16.mxu0 0
      %616 = vmatpush1.bf16.msra.mxu0 0
      %617 = vmatprep.subr.bf16.mxu0 0
      %618 = vmatpush1.bf16.msra.mxu0 0
      %619 = vmatprep.subr.bf16.mxu0 0
      %620 = vmatpush1.bf16.msra.mxu0 0
      %621 = vmatprep.subr.bf16.mxu0 0
      %622 = vmatpush1.bf16.msra.mxu0 0
      %623 = vmatprep.subr.bf16.mxu0 0
      %624 = vmatpush1.bf16.msra.mxu0 0
      %625 = vmatprep.subr.bf16.mxu0 0
      %626 = vmatpush1.bf16.msra.mxu0 0
      %627 = vmatprep.subr.bf16.mxu0 0
      %628 = vmatpush1.bf16.msra.mxu0 0
      %629 = vmatprep.subr.bf16.mxu0 0
      %630 = vmatpush1.bf16.msra.mxu0 0
      %631 = vmatprep.mubr.bf16.mxu0 0
      %632 = vmatmul.mubr.bf16.gmra.mrb[0].mxu0 %v527
      %v633 = vpop.f32.mrb[0].mxu0
      %v634 = vadd.f32 0.0, %v633
      %v635 = vpop.f32.mrb[0].mxu0
      %v636 = vpop.f32.mrb[0].mxu0
      %v637 = vadd.f32 0.0, %v636
      %v638 = vpop.f32.mrb[0].mxu0
      %639 = vmatprep.mubr.bf16.mxu0 0
      %640 = vmatmul.mubr.bf16.gmra.mrb[0].mxu0 %v528
      %v641 = vpop.f32.mrb[0].mxu0
      %v642 = vadd.f32 0.0, %v641
      %v643 = vpop.f32.mrb[0].mxu0
      %v644 = vpop.f32.mrb[0].mxu0
      %v645 = vadd.f32 0.0, %v644
      %v646 = vpop.f32.mrb[0].mxu0
      %647 = vmatprep.mubr.bf16.mxu0 0
      %648 = vmatmul.mubr.bf16.gmra.mrb[0].mxu0 %v529
      %v649 = vpop.f32.mrb[0].mxu0
      %v650 = vadd.f32 0.0, %v649
      %v651 = vpop.f32.mrb[0].mxu0
      %v652 = vpop.f32.mrb[0].mxu0
      %v653 = vadd.f32 0.0, %v652
      %v654 = vpop.f32.mrb[0].mxu0
      %655 = vmatprep.mubr.bf16.mxu0 0
      %656 = vmatmul.mubr.bf16.gmra.mrb[0].mxu0 %v530
      %v657 = vpop.f32.mrb[0].mxu0
      %v658 = vadd.f32 0.0, %v657
      %v659 = vpop.f32.mrb[0].mxu0
      %v660 = vpop.f32.mrb[0].mxu0
      %v661 = vadd.f32 0.0, %v660
      %v662 = vpop.f32.mrb[0].mxu0
      %663 = vmatprep.mubr.bf16.mxu0 0
      %664 = vmatmul.mubr.bf16.gmra.mrb[0].mxu0 %v531
      %v665 = vpop.f32.mrb[0].mxu0
      %v666 = vadd.f32 0.0, %v665
      %v667 = vpop.f32.mrb[0].mxu0
      %v668 = vpop.f32.mrb[0].mxu0
      %v669 = vadd.f32 0.0, %v668
      %v670 = vpop.f32.mrb[0].mxu0
      %671 = vmatprep.mubr.bf16.mxu0 0
      %672 = vmatmul.mubr.bf16.gmra.mrb[0].mxu0 %v532
      %v673 = vpop.f32.mrb[0].mxu0
      %v674 = vadd.f32 0.0, %v673
      %v675 = vpop.f32.mrb[0].mxu0
      %v676 = vpop.f32.mrb[0].mxu0
      %v677 = vadd.f32 0.0, %v676
      %v678 = vpop.f32.mrb[0].mxu0
      %679 = vmatprep.mubr.bf16.mxu0 0
      %680 = vmatmul.mubr.bf16.gmra.mrb[0].mxu0 %v533
      %v681 = vpop.f32.mrb[0].mxu0
      %v682 = vadd.f32 0.0, %v681
      %v683 = vpop.f32.mrb[0].mxu0
      %v684 = vpop.f32.mrb[0].mxu0
      %v685 = vadd.f32 0.0, %v684
      %v686 = vpop.f32.mrb[0].mxu0
      %687 = vmatprep.mubr.bf16.mxu0 0
      %688 = vmatmul.mubr.bf16.gmra.mrb[0].mxu0 %v534
      %v689 = vpop.f32.mrb[0].mxu0
      %v690 = vadd.f32 0.0, %v689
      %v691 = vpop.f32.mrb[0].mxu0
      %v692 = vpop.f32.mrb[0].mxu0
      %v693 = vadd.f32 0.0, %v692
      %v694 = vpop.f32.mrb[0].mxu0
      %695 = vdwg.mxu0
      %v696 = vtanh.pop %v634
      %v697 = vtanh.pop %v637
      %v698 = vtanh.pop %v642
      %v699 = vtanh.pop %v645
      %v700 = vtanh.pop %v650
      %v701 = vtanh.pop %v653
      %v702 = vtanh.pop %v658
      %v703 = vtanh.pop %v661
      %v704 = vtanh.pop %v666
      %v705 = vtanh.pop %v669
      %v706 = vtanh.pop %v674
      %v707 = vtanh.pop %v677
      %v708 = vtanh.pop %v682
      %v709 = vtanh.pop %v685
      %v710 = vtanh.pop %v690
      %v711 = vtanh.pop %v693
      %v712 = vld [vmem:[%s5] sm:$0x1]
      %v714 = vlaneseq
      %v715 = vshrl.u32 %v714, 7
      %v716 = vsub.s32 0, %v715
      %v717 = vrot.slane %v712, %v716
      %v719 = vmul.f32 %v696, %v717
      %v720 = vmul.f32 %v697, %v717
      %v721 = vmul.f32 %v698, %v717
      %v722 = vmul.f32 %v699, %v717
      %v723 = vmul.f32 %v700, %v717
      %v724 = vmul.f32 %v701, %v717
      %v725 = vmul.f32 %v702, %v717
      %v726 = vmul.f32 %v703, %v717
      %v727 = vmul.f32 %v704, %v717
      %v728 = vmul.f32 %v705, %v717
      %v729 = vmul.f32 %v706, %v717
      %v730 = vmul.f32 %v707, %v717
      %v731 = vmul.f32 %v708, %v717
      %v732 = vmul.f32 %v709, %v717
      %v733 = vmul.f32 %v710, %v717
      %v734 = vmul.f32 %v711, %v717
      %vm735 = vcmask 523264
      %v736 = vsel %vm735, %v719, 0.0
      %737 = vadd.xlane.f32.xlu0 %v736
      %v738 = vpop.xlane.xlu0 %737
      %v739 = vsel %vm735, %v720, 0.0
      %740 = vadd.xlane.f32.xlu0 %v739
      %v741 = vpop.xlane.xlu0 %740
      %v742 = vsel %vm735, %v721, 0.0
      %743 = vadd.xlane.f32.xlu0 %v742
      %v744 = vpop.xlane.xlu0 %743
      %v745 = vsel %vm735, %v722, 0.0
      %746 = vadd.xlane.f32.xlu0 %v745
      %v747 = vpop.xlane.xlu0 %746
      %v748 = vsel %vm735, %v723, 0.0
      %749 = vadd.xlane.f32.xlu0 %v748
      %v750 = vpop.xlane.xlu0 %749
      %v751 = vsel %vm735, %v724, 0.0
      %752 = vadd.xlane.f32.xlu0 %v751
      %v753 = vpop.xlane.xlu0 %752
      %v754 = vsel %vm735, %v725, 0.0
      %755 = vadd.xlane.f32.xlu0 %v754
      %v756 = vpop.xlane.xlu0 %755
      %v757 = vsel %vm735, %v726, 0.0
      %758 = vadd.xlane.f32.xlu0 %v757
      %v759 = vpop.xlane.xlu0 %758
      %v760 = vsel %vm735, %v727, 0.0
      %761 = vadd.xlane.f32.xlu0 %v760
      %v762 = vpop.xlane.xlu0 %761
      %v763 = vsel %vm735, %v728, 0.0
      %764 = vadd.xlane.f32.xlu0 %v763
      %v765 = vpop.xlane.xlu0 %764
      %v766 = vsel %vm735, %v729, 0.0
      %767 = vadd.xlane.f32.xlu0 %v766
      %v768 = vpop.xlane.xlu0 %767
      %v769 = vsel %vm735, %v730, 0.0
      %770 = vadd.xlane.f32.xlu0 %v769
      %v771 = vpop.xlane.xlu0 %770
      %v772 = vsel %vm735, %v731, 0.0
      %773 = vadd.xlane.f32.xlu0 %v772
      %v774 = vpop.xlane.xlu0 %773
      %v775 = vsel %vm735, %v732, 0.0
      %776 = vadd.xlane.f32.xlu0 %v775
      %v777 = vpop.xlane.xlu0 %776
      %v778 = vsel %vm735, %v733, 0.0
      %779 = vadd.xlane.f32.xlu0 %v778
      %v780 = vpop.xlane.xlu0 %779
      %v781 = vsel %vm735, %v734, 0.0
      %782 = vadd.xlane.f32.xlu0 %v781
      %v783 = vpop.xlane.xlu0 %782
      %v784 = vld [vmem:[%s269] sm:$0xff]
      %v785 = vld [vmem:[%s269 + $0x8] sm:$0xff]
      %v788 = vlaneseq
      %v789 = vshrl.u32 %v788, 7
      %v790 = vsub.s32 0, %v789
      %v791 = vrot.slane %v784, %v790
      %793 = vbcast.lane.b32.xlu0 %v791, 256
      %v794 = vpop.permute.xlu0 %793
      %v795 = vlaneseq
      %v796 = vshrl.u32 %v795, 7
      %v797 = vsub.s32 1, %v796
      %v798 = vrot.slane %v784, %v797
      %800 = vbcast.lane.b32.xlu0 %v798, 256
      %v801 = vpop.permute.xlu0 %800
      %v802 = vlaneseq
      %v803 = vshrl.u32 %v802, 7
      %v804 = vsub.s32 2, %v803
      %v805 = vrot.slane %v784, %v804
      %807 = vbcast.lane.b32.xlu0 %v805, 256
      %v808 = vpop.permute.xlu0 %807
      %v809 = vlaneseq
      %v810 = vshrl.u32 %v809, 7
      %v811 = vsub.s32 3, %v810
      %v812 = vrot.slane %v784, %v811
      %814 = vbcast.lane.b32.xlu0 %v812, 256
      %v815 = vpop.permute.xlu0 %814
      %v816 = vlaneseq
      %v817 = vshrl.u32 %v816, 7
      %v818 = vsub.s32 4, %v817
      %v819 = vrot.slane %v784, %v818
      %821 = vbcast.lane.b32.xlu0 %v819, 256
      %v822 = vpop.permute.xlu0 %821
      %v823 = vlaneseq
      %v824 = vshrl.u32 %v823, 7
      %v825 = vsub.s32 5, %v824
      %v826 = vrot.slane %v784, %v825
      %828 = vbcast.lane.b32.xlu0 %v826, 256
      %v829 = vpop.permute.xlu0 %828
      %v830 = vlaneseq
      %v831 = vshrl.u32 %v830, 7
      %v832 = vsub.s32 6, %v831
      %v833 = vrot.slane %v784, %v832
      %835 = vbcast.lane.b32.xlu0 %v833, 256
      %v836 = vpop.permute.xlu0 %835
      %v837 = vlaneseq
      %v838 = vshrl.u32 %v837, 7
      %v839 = vsub.s32 7, %v838
      %v840 = vrot.slane %v784, %v839
      %842 = vbcast.lane.b32.xlu0 %v840, 256
      %v843 = vpop.permute.xlu0 %842
      %v844 = vlaneseq
      %v845 = vshrl.u32 %v844, 7
      %v846 = vsub.s32 0, %v845
      %v847 = vrot.slane %v785, %v846
      %849 = vbcast.lane.b32.xlu0 %v847, 256
      %v850 = vpop.permute.xlu0 %849
      %v851 = vlaneseq
      %v852 = vshrl.u32 %v851, 7
      %v853 = vsub.s32 1, %v852
      %v854 = vrot.slane %v785, %v853
      %856 = vbcast.lane.b32.xlu0 %v854, 256
      %v857 = vpop.permute.xlu0 %856
      %v858 = vlaneseq
      %v859 = vshrl.u32 %v858, 7
      %v860 = vsub.s32 2, %v859
      %v861 = vrot.slane %v785, %v860
      %863 = vbcast.lane.b32.xlu0 %v861, 256
      %v864 = vpop.permute.xlu0 %863
      %v865 = vlaneseq
      %v866 = vshrl.u32 %v865, 7
      %v867 = vsub.s32 3, %v866
      %v868 = vrot.slane %v785, %v867
      %870 = vbcast.lane.b32.xlu0 %v868, 256
      %v871 = vpop.permute.xlu0 %870
      %v872 = vlaneseq
      %v873 = vshrl.u32 %v872, 7
      %v874 = vsub.s32 4, %v873
      %v875 = vrot.slane %v785, %v874
      %877 = vbcast.lane.b32.xlu0 %v875, 256
      %v878 = vpop.permute.xlu0 %877
      %v879 = vlaneseq
      %v880 = vshrl.u32 %v879, 7
      %v881 = vsub.s32 5, %v880
      %v882 = vrot.slane %v785, %v881
      %884 = vbcast.lane.b32.xlu0 %v882, 256
      %v885 = vpop.permute.xlu0 %884
      %v886 = vlaneseq
      %v887 = vshrl.u32 %v886, 7
      %v888 = vsub.s32 6, %v887
      %v889 = vrot.slane %v785, %v888
      %891 = vbcast.lane.b32.xlu0 %v889, 256
      %v892 = vpop.permute.xlu0 %891
      %v893 = vlaneseq
      %v894 = vshrl.u32 %v893, 7
      %v895 = vsub.s32 7, %v894
      %v896 = vrot.slane %v785, %v895
      %898 = vbcast.lane.b32.xlu0 %v896, 256
      %v899 = vpop.permute.xlu0 %898
      %v916 = vadd.f32 %v738, %v794
      %v917 = vadd.f32 %v741, %v801
      %v918 = vadd.f32 %v744, %v808
      %v919 = vadd.f32 %v747, %v815
      %v920 = vadd.f32 %v750, %v822
      %v921 = vadd.f32 %v753, %v829
      %v922 = vadd.f32 %v756, %v836
      %v923 = vadd.f32 %v759, %v843
      %v924 = vadd.f32 %v762, %v850
      %v925 = vadd.f32 %v765, %v857
      %v926 = vadd.f32 %v768, %v864
      %v927 = vadd.f32 %v771, %v871
      %v928 = vadd.f32 %v774, %v878
      %v929 = vadd.f32 %v777, %v885
      %v930 = vadd.f32 %v780, %v892
      %v931 = vadd.f32 %v783, %v899
      %948 = vset.pattern.permute.xlu0 0
      %949 = vperm.xlu0 %948, %v916
      %v950 = vpop.permute.xlu0 %949
      %951 = vset.pattern.permute.xlu0 0
      %952 = vperm.xlu0 %951, %v917
      %v953 = vpop.permute.xlu0 %952
      %954 = vset.pattern.permute.xlu0 0
      %955 = vperm.xlu0 %954, %v918
      %v956 = vpop.permute.xlu0 %955
      %957 = vset.pattern.permute.xlu0 0
      %958 = vperm.xlu0 %957, %v919
      %v959 = vpop.permute.xlu0 %958
      %960 = vset.pattern.permute.xlu0 0
      %961 = vperm.xlu0 %960, %v920
      %v962 = vpop.permute.xlu0 %961
      %963 = vset.pattern.permute.xlu0 0
      %964 = vperm.xlu0 %963, %v921
      %v965 = vpop.permute.xlu0 %964
      %966 = vset.pattern.permute.xlu0 0
      %967 = vperm.xlu0 %966, %v922
      %v968 = vpop.permute.xlu0 %967
      %969 = vset.pattern.permute.xlu0 0
      %970 = vperm.xlu0 %969, %v923
      %v971 = vpop.permute.xlu0 %970
      %972 = vset.pattern.permute.xlu0 0
      %973 = vperm.xlu0 %972, %v924
      %v974 = vpop.permute.xlu0 %973
      %975 = vset.pattern.permute.xlu0 0
      %976 = vperm.xlu0 %975, %v925
      %v977 = vpop.permute.xlu0 %976
      %978 = vset.pattern.permute.xlu0 0
      %979 = vperm.xlu0 %978, %v926
      %v980 = vpop.permute.xlu0 %979
      %981 = vset.pattern.permute.xlu0 0
      %982 = vperm.xlu0 %981, %v927
      %v983 = vpop.permute.xlu0 %982
      %984 = vset.pattern.permute.xlu0 0
      %985 = vperm.xlu0 %984, %v928
      %v986 = vpop.permute.xlu0 %985
      %987 = vset.pattern.permute.xlu0 0
      %988 = vperm.xlu0 %987, %v929
      %v989 = vpop.permute.xlu0 %988
      %990 = vset.pattern.permute.xlu0 0
      %991 = vperm.xlu0 %990, %v930
      %v992 = vpop.permute.xlu0 %991
      %993 = vset.pattern.permute.xlu0 0
      %994 = vperm.xlu0 %993, %v931
      %v995 = vpop.permute.xlu0 %994
      %v996 = vlaneseq
      %v997 = vand.u32 %v996, 127
      %v998 = vlaneseq
      %v999 = vshrl.u32 %v998, 7
      %v1000 = vsub.s32 %v997, %v999
      %v1001 = vrot.slane %v950, %v1000
      %v1002 = vlaneseq
      %v1003 = vshrl.u32 %v1002, 7
      %v1004 = vsub.s32 %v997, %v1003
      %v1005 = vrot.slane %v953, %v1004
      %v1006 = vlaneseq
      %v1007 = vshrl.u32 %v1006, 7
      %v1008 = vsub.s32 %v997, %v1007
      %v1009 = vrot.slane %v956, %v1008
      %v1010 = vlaneseq
      %v1011 = vshrl.u32 %v1010, 7
      %v1012 = vsub.s32 %v997, %v1011
      %v1013 = vrot.slane %v959, %v1012
      %v1014 = vlaneseq
      %v1015 = vshrl.u32 %v1014, 7
      %v1016 = vsub.s32 %v997, %v1015
      %v1017 = vrot.slane %v962, %v1016
      %v1018 = vlaneseq
      %v1019 = vshrl.u32 %v1018, 7
      %v1020 = vsub.s32 %v997, %v1019
      %v1021 = vrot.slane %v965, %v1020
      %v1022 = vlaneseq
      %v1023 = vshrl.u32 %v1022, 7
      %v1024 = vsub.s32 %v997, %v1023
      %v1025 = vrot.slane %v968, %v1024
      %v1026 = vlaneseq
      %v1027 = vshrl.u32 %v1026, 7
      %v1028 = vsub.s32 %v997, %v1027
      %v1029 = vrot.slane %v971, %v1028
      %v1030 = vlaneseq
      %v1031 = vshrl.u32 %v1030, 7
      %v1032 = vsub.s32 %v997, %v1031
      %v1033 = vrot.slane %v974, %v1032
      %v1034 = vlaneseq
      %v1035 = vshrl.u32 %v1034, 7
      %v1036 = vsub.s32 %v997, %v1035
      %v1037 = vrot.slane %v977, %v1036
      %v1038 = vlaneseq
      %v1039 = vshrl.u32 %v1038, 7
      %v1040 = vsub.s32 %v997, %v1039
      %v1041 = vrot.slane %v980, %v1040
      %v1042 = vlaneseq
      %v1043 = vshrl.u32 %v1042, 7
      %v1044 = vsub.s32 %v997, %v1043
      %v1045 = vrot.slane %v983, %v1044
      %v1046 = vlaneseq
      %v1047 = vshrl.u32 %v1046, 7
      %v1048 = vsub.s32 %v997, %v1047
      %v1049 = vrot.slane %v986, %v1048
      %v1050 = vlaneseq
      %v1051 = vshrl.u32 %v1050, 7
      %v1052 = vsub.s32 %v997, %v1051
      %v1053 = vrot.slane %v989, %v1052
      %v1054 = vlaneseq
      %v1055 = vshrl.u32 %v1054, 7
      %v1056 = vsub.s32 %v997, %v1055
      %v1057 = vrot.slane %v992, %v1056
      %v1058 = vlaneseq
      %v1059 = vshrl.u32 %v1058, 7
      %v1060 = vsub.s32 %v997, %v1059
      %v1061 = vrot.slane %v995, %v1060
      %vm1062 = vcmask 1041409
      %v1063 = vsel %vm1062, %v1005, %v1001
      %vm1064 = vcmask 1042434
      %v1065 = vsel %vm1064, %v1009, %v1063
      %vm1066 = vcmask 1043459
      %v1067 = vsel %vm1066, %v1013, %v1065
      %vm1068 = vcmask 1044484
      %v1069 = vsel %vm1068, %v1017, %v1067
      %vm1070 = vcmask 1045509
      %v1071 = vsel %vm1070, %v1021, %v1069
      %vm1072 = vcmask 1046534
      %v1073 = vsel %vm1072, %v1025, %v1071
      %vm1074 = vcmask 1047559
      %v1075 = vsel %vm1074, %v1029, %v1073
      %v1076 = vsel %vm1062, %v1037, %v1033
      %v1077 = vsel %vm1064, %v1041, %v1076
      %v1078 = vsel %vm1066, %v1045, %v1077
      %v1079 = vsel %vm1068, %v1049, %v1078
      %v1080 = vsel %vm1070, %v1053, %v1079
      %v1081 = vsel %vm1072, %v1057, %v1080
      %v1082 = vsel %vm1074, %v1061, %v1081
      %vm1085 = vcmask 64512
      %v1086 = vsel %vm1085, %v1075, -inf
      %1087 = vmax.xlane.f32.xlu0 %v1086
      %v1088 = vpop.xlane.xlu0 %1087
      %v1089 = vsel %vm1085, %v1082, -inf
      %1090 = vmax.xlane.f32.xlu0 %v1089
      %v1091 = vpop.xlane.xlu0 %1090
      %v1094 = vlaneseq
      %v1095 = vshrl.u32 %v1094, 7
      %v1096 = vsub.s32 0, %v1095
      %v1097 = vrot.slane %v1088, %v1096
      %v1098 = vlaneseq
      %v1099 = vshrl.u32 %v1098, 7
      %v1100 = vsub.s32 1, %v1099
      %v1101 = vrot.slane %v1088, %v1100
      %v1102 = vlaneseq
      %v1103 = vshrl.u32 %v1102, 7
      %v1104 = vsub.s32 2, %v1103
      %v1105 = vrot.slane %v1088, %v1104
      %v1106 = vlaneseq
      %v1107 = vshrl.u32 %v1106, 7
      %v1108 = vsub.s32 3, %v1107
      %v1109 = vrot.slane %v1088, %v1108
      %v1110 = vlaneseq
      %v1111 = vshrl.u32 %v1110, 7
      %v1112 = vsub.s32 4, %v1111
      %v1113 = vrot.slane %v1088, %v1112
      %v1114 = vlaneseq
      %v1115 = vshrl.u32 %v1114, 7
      %v1116 = vsub.s32 5, %v1115
      %v1117 = vrot.slane %v1088, %v1116
      %v1118 = vlaneseq
      %v1119 = vshrl.u32 %v1118, 7
      %v1120 = vsub.s32 6, %v1119
      %v1121 = vrot.slane %v1088, %v1120
      %v1122 = vlaneseq
      %v1123 = vshrl.u32 %v1122, 7
      %v1124 = vsub.s32 7, %v1123
      %v1125 = vrot.slane %v1088, %v1124
      %v1126 = vlaneseq
      %v1127 = vshrl.u32 %v1126, 7
      %v1128 = vsub.s32 0, %v1127
      %v1129 = vrot.slane %v1091, %v1128
      %v1130 = vlaneseq
      %v1131 = vshrl.u32 %v1130, 7
      %v1132 = vsub.s32 1, %v1131
      %v1133 = vrot.slane %v1091, %v1132
      %v1134 = vlaneseq
      %v1135 = vshrl.u32 %v1134, 7
      %v1136 = vsub.s32 2, %v1135
      %v1137 = vrot.slane %v1091, %v1136
      %v1138 = vlaneseq
      %v1139 = vshrl.u32 %v1138, 7
      %v1140 = vsub.s32 3, %v1139
      %v1141 = vrot.slane %v1091, %v1140
      %v1142 = vlaneseq
      %v1143 = vshrl.u32 %v1142, 7
      %v1144 = vsub.s32 4, %v1143
      %v1145 = vrot.slane %v1091, %v1144
      %v1146 = vlaneseq
      %v1147 = vshrl.u32 %v1146, 7
      %v1148 = vsub.s32 5, %v1147
      %v1149 = vrot.slane %v1091, %v1148
      %v1150 = vlaneseq
      %v1151 = vshrl.u32 %v1150, 7
      %v1152 = vsub.s32 6, %v1151
      %v1153 = vrot.slane %v1091, %v1152
      %v1154 = vlaneseq
      %v1155 = vshrl.u32 %v1154, 7
      %v1156 = vsub.s32 7, %v1155
      %v1157 = vrot.slane %v1091, %v1156
      %v1174 = vsub.f32 %v916, %v1097
      %v1175 = vsub.f32 %v917, %v1101
      %v1176 = vsub.f32 %v918, %v1105
      %v1177 = vsub.f32 %v919, %v1109
      %v1178 = vsub.f32 %v920, %v1113
      %v1179 = vsub.f32 %v921, %v1117
      %v1180 = vsub.f32 %v922, %v1121
      %v1181 = vsub.f32 %v923, %v1125
      %v1182 = vsub.f32 %v924, %v1129
      %v1183 = vsub.f32 %v925, %v1133
      %v1184 = vsub.f32 %v926, %v1137
      %v1185 = vsub.f32 %v927, %v1141
      %v1186 = vsub.f32 %v928, %v1145
      %v1187 = vsub.f32 %v929, %v1149
      %v1188 = vsub.f32 %v930, %v1153
      %v1189 = vsub.f32 %v931, %v1157
      %v1190 = vmul.f32 %v1174, 1.442695
      %v1191 = vpow.pop %v1190
      %v1192 = vmul.f32 %v1175, 1.442695
      %v1193 = vpow.pop %v1192
      %v1194 = vmul.f32 %v1176, 1.442695
      %v1195 = vpow.pop %v1194
      %v1196 = vmul.f32 %v1177, 1.442695
      %v1197 = vpow.pop %v1196
      %v1198 = vmul.f32 %v1178, 1.442695
      %v1199 = vpow.pop %v1198
      %v1200 = vmul.f32 %v1179, 1.442695
      %v1201 = vpow.pop %v1200
      %v1202 = vmul.f32 %v1180, 1.442695
      %v1203 = vpow.pop %v1202
      %v1204 = vmul.f32 %v1181, 1.442695
      %v1205 = vpow.pop %v1204
      %v1206 = vmul.f32 %v1182, 1.442695
      %v1207 = vpow.pop %v1206
      %v1208 = vmul.f32 %v1183, 1.442695
      %v1209 = vpow.pop %v1208
      %v1210 = vmul.f32 %v1184, 1.442695
      %v1211 = vpow.pop %v1210
      %v1212 = vmul.f32 %v1185, 1.442695
      %v1213 = vpow.pop %v1212
      %v1214 = vmul.f32 %v1186, 1.442695
      %v1215 = vpow.pop %v1214
      %v1216 = vmul.f32 %v1187, 1.442695
      %v1217 = vpow.pop %v1216
      %v1218 = vmul.f32 %v1188, 1.442695
      %v1219 = vpow.pop %v1218
      %v1220 = vmul.f32 %v1189, 1.442695
      %v1221 = vpow.pop %v1220
      %1238 = vset.pattern.permute.xlu0 0
      %1239 = vperm.xlu0 %1238, %v1191
      %v1240 = vpop.permute.xlu0 %1239
      %1241 = vset.pattern.permute.xlu0 0
      %1242 = vperm.xlu0 %1241, %v1193
      %v1243 = vpop.permute.xlu0 %1242
      %1244 = vset.pattern.permute.xlu0 0
      %1245 = vperm.xlu0 %1244, %v1195
      %v1246 = vpop.permute.xlu0 %1245
      %1247 = vset.pattern.permute.xlu0 0
      %1248 = vperm.xlu0 %1247, %v1197
      %v1249 = vpop.permute.xlu0 %1248
      %1250 = vset.pattern.permute.xlu0 0
      %1251 = vperm.xlu0 %1250, %v1199
      %v1252 = vpop.permute.xlu0 %1251
      %1253 = vset.pattern.permute.xlu0 0
      %1254 = vperm.xlu0 %1253, %v1201
      %v1255 = vpop.permute.xlu0 %1254
      %1256 = vset.pattern.permute.xlu0 0
      %1257 = vperm.xlu0 %1256, %v1203
      %v1258 = vpop.permute.xlu0 %1257
      %1259 = vset.pattern.permute.xlu0 0
      %1260 = vperm.xlu0 %1259, %v1205
      %v1261 = vpop.permute.xlu0 %1260
      %1262 = vset.pattern.permute.xlu0 0
      %1263 = vperm.xlu0 %1262, %v1207
      %v1264 = vpop.permute.xlu0 %1263
      %1265 = vset.pattern.permute.xlu0 0
      %1266 = vperm.xlu0 %1265, %v1209
      %v1267 = vpop.permute.xlu0 %1266
      %1268 = vset.pattern.permute.xlu0 0
      %1269 = vperm.xlu0 %1268, %v1211
      %v1270 = vpop.permute.xlu0 %1269
      %1271 = vset.pattern.permute.xlu0 0
      %1272 = vperm.xlu0 %1271, %v1213
      %v1273 = vpop.permute.xlu0 %1272
      %1274 = vset.pattern.permute.xlu0 0
      %1275 = vperm.xlu0 %1274, %v1215
      %v1276 = vpop.permute.xlu0 %1275
      %1277 = vset.pattern.permute.xlu0 0
      %1278 = vperm.xlu0 %1277, %v1217
      %v1279 = vpop.permute.xlu0 %1278
      %1280 = vset.pattern.permute.xlu0 0
      %1281 = vperm.xlu0 %1280, %v1219
      %v1282 = vpop.permute.xlu0 %1281
      %1283 = vset.pattern.permute.xlu0 0
      %1284 = vperm.xlu0 %1283, %v1221
      %v1285 = vpop.permute.xlu0 %1284
      %v1286 = vlaneseq
      %v1287 = vshrl.u32 %v1286, 7
      %v1288 = vsub.s32 %v997, %v1287
      %v1289 = vrot.slane %v1240, %v1288
      %v1290 = vlaneseq
      %v1291 = vshrl.u32 %v1290, 7
      %v1292 = vsub.s32 %v997, %v1291
      %v1293 = vrot.slane %v1243, %v1292
      %v1294 = vlaneseq
      %v1295 = vshrl.u32 %v1294, 7
      %v1296 = vsub.s32 %v997, %v1295
      %v1297 = vrot.slane %v1246, %v1296
      %v1298 = vlaneseq
      %v1299 = vshrl.u32 %v1298, 7
      %v1300 = vsub.s32 %v997, %v1299
      %v1301 = vrot.slane %v1249, %v1300
      %v1302 = vlaneseq
      %v1303 = vshrl.u32 %v1302, 7
      %v1304 = vsub.s32 %v997, %v1303
      %v1305 = vrot.slane %v1252, %v1304
      %v1306 = vlaneseq
      %v1307 = vshrl.u32 %v1306, 7
      %v1308 = vsub.s32 %v997, %v1307
      %v1309 = vrot.slane %v1255, %v1308
      %v1310 = vlaneseq
      %v1311 = vshrl.u32 %v1310, 7
      %v1312 = vsub.s32 %v997, %v1311
      %v1313 = vrot.slane %v1258, %v1312
      %v1314 = vlaneseq
      %v1315 = vshrl.u32 %v1314, 7
      %v1316 = vsub.s32 %v997, %v1315
      %v1317 = vrot.slane %v1261, %v1316
      %v1318 = vlaneseq
      %v1319 = vshrl.u32 %v1318, 7
      %v1320 = vsub.s32 %v997, %v1319
      %v1321 = vrot.slane %v1264, %v1320
      %v1322 = vlaneseq
      %v1323 = vshrl.u32 %v1322, 7
      %v1324 = vsub.s32 %v997, %v1323
      %v1325 = vrot.slane %v1267, %v1324
      %v1326 = vlaneseq
      %v1327 = vshrl.u32 %v1326, 7
      %v1328 = vsub.s32 %v997, %v1327
      %v1329 = vrot.slane %v1270, %v1328
      %v1330 = vlaneseq
      %v1331 = vshrl.u32 %v1330, 7
      %v1332 = vsub.s32 %v997, %v1331
      %v1333 = vrot.slane %v1273, %v1332
      %v1334 = vlaneseq
      %v1335 = vshrl.u32 %v1334, 7
      %v1336 = vsub.s32 %v997, %v1335
      %v1337 = vrot.slane %v1276, %v1336
      %v1338 = vlaneseq
      %v1339 = vshrl.u32 %v1338, 7
      %v1340 = vsub.s32 %v997, %v1339
      %v1341 = vrot.slane %v1279, %v1340
      %v1342 = vlaneseq
      %v1343 = vshrl.u32 %v1342, 7
      %v1344 = vsub.s32 %v997, %v1343
      %v1345 = vrot.slane %v1282, %v1344
      %v1346 = vlaneseq
      %v1347 = vshrl.u32 %v1346, 7
      %v1348 = vsub.s32 %v997, %v1347
      %v1349 = vrot.slane %v1285, %v1348
      %v1350 = vsel %vm1062, %v1293, %v1289
      %v1351 = vsel %vm1064, %v1297, %v1350
      %v1352 = vsel %vm1066, %v1301, %v1351
      %v1353 = vsel %vm1068, %v1305, %v1352
      %v1354 = vsel %vm1070, %v1309, %v1353
      %v1355 = vsel %vm1072, %v1313, %v1354
      %v1356 = vsel %vm1074, %v1317, %v1355
      %v1357 = vsel %vm1062, %v1325, %v1321
      %v1358 = vsel %vm1064, %v1329, %v1357
      %v1359 = vsel %vm1066, %v1333, %v1358
      %v1360 = vsel %vm1068, %v1337, %v1359
      %v1361 = vsel %vm1070, %v1341, %v1360
      %v1362 = vsel %vm1072, %v1345, %v1361
      %v1363 = vsel %vm1074, %v1349, %v1362
      %v1366 = vsel %vm1085, %v1356, 0.0
      %1367 = vadd.xlane.f32.xlu0 %v1366
      %v1368 = vpop.xlane.xlu0 %1367
      %v1369 = vsel %vm1085, %v1363, 0.0
      %1370 = vadd.xlane.f32.xlu0 %v1369
      %v1371 = vpop.xlane.xlu0 %1370
      %v1372 = vrcp.pop %v1368
      %v1373 = vrcp.pop %v1371
      %v1376 = vlaneseq
      %v1377 = vshrl.u32 %v1376, 7
      %v1378 = vsub.s32 0, %v1377
      %v1379 = vrot.slane %v1372, %v1378
      %v1380 = vlaneseq
      %v1381 = vshrl.u32 %v1380, 7
      %v1382 = vsub.s32 1, %v1381
      %v1383 = vrot.slane %v1372, %v1382
      %v1384 = vlaneseq
      %v1385 = vshrl.u32 %v1384, 7
      %v1386 = vsub.s32 2, %v1385
      %v1387 = vrot.slane %v1372, %v1386
      %v1388 = vlaneseq
      %v1389 = vshrl.u32 %v1388, 7
      %v1390 = vsub.s32 3, %v1389
      %v1391 = vrot.slane %v1372, %v1390
      %v1392 = vlaneseq
      %v1393 = vshrl.u32 %v1392, 7
      %v1394 = vsub.s32 4, %v1393
      %v1395 = vrot.slane %v1372, %v1394
      %v1396 = vlaneseq
      %v1397 = vshrl.u32 %v1396, 7
      %v1398 = vsub.s32 5, %v1397
      %v1399 = vrot.slane %v1372, %v1398
      %v1400 = vlaneseq
      %v1401 = vshrl.u32 %v1400, 7
      %v1402 = vsub.s32 6, %v1401
      %v1403 = vrot.slane %v1372, %v1402
      %v1404 = vlaneseq
      %v1405 = vshrl.u32 %v1404, 7
      %v1406 = vsub.s32 7, %v1405
      %v1407 = vrot.slane %v1372, %v1406
      %v1408 = vlaneseq
      %v1409 = vshrl.u32 %v1408, 7
      %v1410 = vsub.s32 0, %v1409
      %v1411 = vrot.slane %v1373, %v1410
      %v1412 = vlaneseq
      %v1413 = vshrl.u32 %v1412, 7
      %v1414 = vsub.s32 1, %v1413
      %v1415 = vrot.slane %v1373, %v1414
      %v1416 = vlaneseq
      %v1417 = vshrl.u32 %v1416, 7
      %v1418 = vsub.s32 2, %v1417
      %v1419 = vrot.slane %v1373, %v1418
      %v1420 = vlaneseq
      %v1421 = vshrl.u32 %v1420, 7
      %v1422 = vsub.s32 3, %v1421
      %v1423 = vrot.slane %v1373, %v1422
      %v1424 = vlaneseq
      %v1425 = vshrl.u32 %v1424, 7
      %v1426 = vsub.s32 4, %v1425
      %v1427 = vrot.slane %v1373, %v1426
      %v1428 = vlaneseq
      %v1429 = vshrl.u32 %v1428, 7
      %v1430 = vsub.s32 5, %v1429
      %v1431 = vrot.slane %v1373, %v1430
      %v1432 = vlaneseq
      %v1433 = vshrl.u32 %v1432, 7
      %v1434 = vsub.s32 6, %v1433
      %v1435 = vrot.slane %v1373, %v1434
      %v1436 = vlaneseq
      %v1437 = vshrl.u32 %v1436, 7
      %v1438 = vsub.s32 7, %v1437
      %v1439 = vrot.slane %v1373, %v1438
      %v1456 = vmul.f32 %v1191, %v1379
      %v1457 = vmul.f32 %v1193, %v1383
      %v1458 = vmul.f32 %v1195, %v1387
      %v1459 = vmul.f32 %v1197, %v1391
      %v1460 = vmul.f32 %v1199, %v1395
      %v1461 = vmul.f32 %v1201, %v1399
      %v1462 = vmul.f32 %v1203, %v1403
      %v1463 = vmul.f32 %v1205, %v1407
      %v1464 = vmul.f32 %v1207, %v1411
      %v1465 = vmul.f32 %v1209, %v1415
      %v1466 = vmul.f32 %v1211, %v1419
      %v1467 = vmul.f32 %v1213, %v1423
      %v1468 = vmul.f32 %v1215, %v1427
      %v1469 = vmul.f32 %v1217, %v1431
      %v1470 = vmul.f32 %v1219, %v1435
      %v1471 = vmul.f32 %v1221, %v1439
      %1473 = vset.pattern.permute.xlu0 0
      %1474 = vperm.xlu0 %1473, %v1456
      %v1475 = vpop.permute.xlu0 %1474
      %1478 = vset.pattern.permute.xlu0 0
      %1479 = vperm.xlu0 %1478, %v1457
      %v1480 = vpop.permute.xlu0 %1479
      %1483 = vset.pattern.permute.xlu0 0
      %1484 = vperm.xlu0 %1483, %v1458
      %v1485 = vpop.permute.xlu0 %1484
      %1488 = vset.pattern.permute.xlu0 0
      %1489 = vperm.xlu0 %1488, %v1459
      %v1490 = vpop.permute.xlu0 %1489
      %1493 = vset.pattern.permute.xlu0 0
      %1494 = vperm.xlu0 %1493, %v1460
      %v1495 = vpop.permute.xlu0 %1494
      %1498 = vset.pattern.permute.xlu0 0
      %1499 = vperm.xlu0 %1498, %v1461
      %v1500 = vpop.permute.xlu0 %1499
      %1503 = vset.pattern.permute.xlu0 0
      %1504 = vperm.xlu0 %1503, %v1462
      %v1505 = vpop.permute.xlu0 %1504
      %1508 = vset.pattern.permute.xlu0 0
      %1509 = vperm.xlu0 %1508, %v1463
      %v1510 = vpop.permute.xlu0 %1509
      %1513 = vset.pattern.permute.xlu0 0
      %1514 = vperm.xlu0 %1513, %v1464
      %v1515 = vpop.permute.xlu0 %1514
      %1518 = vset.pattern.permute.xlu0 0
      %1519 = vperm.xlu0 %1518, %v1465
      %v1520 = vpop.permute.xlu0 %1519
      %1523 = vset.pattern.permute.xlu0 0
      %1524 = vperm.xlu0 %1523, %v1466
      %v1525 = vpop.permute.xlu0 %1524
      %1528 = vset.pattern.permute.xlu0 0
      %1529 = vperm.xlu0 %1528, %v1467
      %v1530 = vpop.permute.xlu0 %1529
      %1533 = vset.pattern.permute.xlu0 0
      %1534 = vperm.xlu0 %1533, %v1468
      %v1535 = vpop.permute.xlu0 %1534
      %1538 = vset.pattern.permute.xlu0 0
      %1539 = vperm.xlu0 %1538, %v1469
      %v1540 = vpop.permute.xlu0 %1539
      %1543 = vset.pattern.permute.xlu0 0
      %1544 = vperm.xlu0 %1543, %v1470
      %v1545 = vpop.permute.xlu0 %1544
      %1548 = vset.pattern.permute.xlu0 0
      %1549 = vperm.xlu0 %1548, %v1471
      %v1550 = vpop.permute.xlu0 %1549
      %v1552 = vmul.f32 %v511, %v1475
      %v1553 = vmul.f32 %v512, %v1480
      %v1554 = vmul.f32 %v513, %v1485
      %v1555 = vmul.f32 %v514, %v1490
      %v1556 = vmul.f32 %v515, %v1495
      %v1557 = vmul.f32 %v516, %v1500
      %v1558 = vmul.f32 %v517, %v1505
      %v1559 = vmul.f32 %v518, %v1510
      %v1560 = vmul.f32 %v519, %v1515
      %v1561 = vmul.f32 %v520, %v1520
      %v1562 = vmul.f32 %v521, %v1525
      %v1563 = vmul.f32 %v522, %v1530
      %v1564 = vmul.f32 %v523, %v1535
      %v1565 = vmul.f32 %v524, %v1540
      %v1566 = vmul.f32 %v525, %v1545
      %v1567 = vmul.f32 %v526, %v1550
      %v1568 = vrot.slane %v1552, 4
      %v1569 = vadd.f32 %v1552, %v1568
      %v1570 = vrot.slane %v1569, 2
      %v1571 = vadd.f32 %v1569, %v1570
      %v1572 = vrot.slane %v1571, 1
      %v1573 = vadd.f32 %v1571, %v1572
      %v1574 = vrot.slane %v1553, 4
      %v1575 = vadd.f32 %v1553, %v1574
      %v1576 = vrot.slane %v1575, 2
      %v1577 = vadd.f32 %v1575, %v1576
      %v1578 = vrot.slane %v1577, 1
      %v1579 = vadd.f32 %v1577, %v1578
      %v1580 = vrot.slane %v1554, 4
      %v1581 = vadd.f32 %v1554, %v1580
      %v1582 = vrot.slane %v1581, 2
      %v1583 = vadd.f32 %v1581, %v1582
      %v1584 = vrot.slane %v1583, 1
      %v1585 = vadd.f32 %v1583, %v1584
      %v1586 = vrot.slane %v1555, 4
      %v1587 = vadd.f32 %v1555, %v1586
      %v1588 = vrot.slane %v1587, 2
      %v1589 = vadd.f32 %v1587, %v1588
      %v1590 = vrot.slane %v1589, 1
      %v1591 = vadd.f32 %v1589, %v1590
      %v1592 = vrot.slane %v1556, 4
      %v1593 = vadd.f32 %v1556, %v1592
      %v1594 = vrot.slane %v1593, 2
      %v1595 = vadd.f32 %v1593, %v1594
      %v1596 = vrot.slane %v1595, 1
      %v1597 = vadd.f32 %v1595, %v1596
      %v1598 = vrot.slane %v1557, 4
      %v1599 = vadd.f32 %v1557, %v1598
      %v1600 = vrot.slane %v1599, 2
      %v1601 = vadd.f32 %v1599, %v1600
      %v1602 = vrot.slane %v1601, 1
      %v1603 = vadd.f32 %v1601, %v1602
      %v1604 = vrot.slane %v1558, 4
      %v1605 = vadd.f32 %v1558, %v1604
      %v1606 = vrot.slane %v1605, 2
      %v1607 = vadd.f32 %v1605, %v1606
      %v1608 = vrot.slane %v1607, 1
      %v1609 = vadd.f32 %v1607, %v1608
      %v1610 = vrot.slane %v1559, 4
      %v1611 = vadd.f32 %v1559, %v1610
      %v1612 = vrot.slane %v1611, 2
      %v1613 = vadd.f32 %v1611, %v1612
      %v1614 = vrot.slane %v1613, 1
      %v1615 = vadd.f32 %v1613, %v1614
      %v1616 = vrot.slane %v1560, 4
      %v1617 = vadd.f32 %v1560, %v1616
      %v1618 = vrot.slane %v1617, 2
      %v1619 = vadd.f32 %v1617, %v1618
      %v1620 = vrot.slane %v1619, 1
      %v1621 = vadd.f32 %v1619, %v1620
      %v1622 = vrot.slane %v1561, 4
      %v1623 = vadd.f32 %v1561, %v1622
      %v1624 = vrot.slane %v1623, 2
      %v1625 = vadd.f32 %v1623, %v1624
      %v1626 = vrot.slane %v1625, 1
      %v1627 = vadd.f32 %v1625, %v1626
      %v1628 = vrot.slane %v1562, 4
      %v1629 = vadd.f32 %v1562, %v1628
      %v1630 = vrot.slane %v1629, 2
      %v1631 = vadd.f32 %v1629, %v1630
      %v1632 = vrot.slane %v1631, 1
      %v1633 = vadd.f32 %v1631, %v1632
      %v1634 = vrot.slane %v1563, 4
      %v1635 = vadd.f32 %v1563, %v1634
      %v1636 = vrot.slane %v1635, 2
      %v1637 = vadd.f32 %v1635, %v1636
      %v1638 = vrot.slane %v1637, 1
      %v1639 = vadd.f32 %v1637, %v1638
      %v1640 = vrot.slane %v1564, 4
      %v1641 = vadd.f32 %v1564, %v1640
      %v1642 = vrot.slane %v1641, 2
      %v1643 = vadd.f32 %v1641, %v1642
      %v1644 = vrot.slane %v1643, 1
      %v1645 = vadd.f32 %v1643, %v1644
      %v1646 = vrot.slane %v1565, 4
      %v1647 = vadd.f32 %v1565, %v1646
      %v1648 = vrot.slane %v1647, 2
      %v1649 = vadd.f32 %v1647, %v1648
      %v1650 = vrot.slane %v1649, 1
      %v1651 = vadd.f32 %v1649, %v1650
      %v1652 = vrot.slane %v1566, 4
      %v1653 = vadd.f32 %v1566, %v1652
      %v1654 = vrot.slane %v1653, 2
      %v1655 = vadd.f32 %v1653, %v1654
      %v1656 = vrot.slane %v1655, 1
      %v1657 = vadd.f32 %v1655, %v1656
      %v1658 = vrot.slane %v1567, 4
      %v1659 = vadd.f32 %v1567, %v1658
      %v1660 = vrot.slane %v1659, 2
      %v1661 = vadd.f32 %v1659, %v1660
      %v1662 = vrot.slane %v1661, 1
      %v1663 = vadd.f32 %v1661, %v1662
      %v1664 = vpack.c.bf16 %v1573, %v1573
      %v1665 = vpack.c.bf16 %v1579, %v1579
      %v1666 = vpack.c.bf16 %v1585, %v1585
      %v1667 = vpack.c.bf16 %v1591, %v1591
      %v1668 = vpack.c.bf16 %v1597, %v1597
      %v1669 = vpack.c.bf16 %v1603, %v1603
      %v1670 = vpack.c.bf16 %v1609, %v1609
      %v1671 = vpack.c.bf16 %v1615, %v1615
      %v1672 = vpack.c.bf16 %v1621, %v1621
      %v1673 = vpack.c.bf16 %v1627, %v1627
      %v1674 = vpack.c.bf16 %v1633, %v1633
      %v1675 = vpack.c.bf16 %v1639, %v1639
      %v1676 = vpack.c.bf16 %v1645, %v1645
      %v1677 = vpack.c.bf16 %v1651, %v1651
      %v1678 = vpack.c.bf16 %v1657, %v1657
      %v1679 = vpack.c.bf16 %v1663, %v1663
      %v1696 = vunpack.c.l.b16 %v1664
      %v1697 = vunpack.c.l.b16 %v1665
      %v1698 = vunpack.c.l.b16 %v1666
      %v1699 = vunpack.c.l.b16 %v1667
      %v1700 = vunpack.c.l.b16 %v1668
      %v1701 = vunpack.c.l.b16 %v1669
      %v1702 = vunpack.c.l.b16 %v1670
      %v1703 = vunpack.c.l.b16 %v1671
      %v1704 = vunpack.c.l.b16 %v1672
      %v1705 = vunpack.c.l.b16 %v1673
      %v1706 = vunpack.c.l.b16 %v1674
      %v1707 = vunpack.c.l.b16 %v1675
      %v1708 = vunpack.c.l.b16 %v1676
      %v1709 = vunpack.c.l.b16 %v1677
      %v1710 = vunpack.c.l.b16 %v1678
      %v1711 = vunpack.c.l.b16 %v1679
      %v1712 = vpack.c.b16 %v1696, %v1696
      %v1713 = vpack.c.b16 %v1697, %v1697
      %v1714 = vpack.c.b16 %v1698, %v1698
      %v1715 = vpack.c.b16 %v1699, %v1699
      %v1716 = vpack.c.b16 %v1700, %v1700
      %v1717 = vpack.c.b16 %v1701, %v1701
      %v1718 = vpack.c.b16 %v1702, %v1702
      %v1719 = vpack.c.b16 %v1703, %v1703
      %v1720 = vpack.c.b16 %v1704, %v1704
      %v1721 = vpack.c.b16 %v1705, %v1705
      %v1722 = vpack.c.b16 %v1706, %v1706
      %v1723 = vpack.c.b16 %v1707, %v1707
      %v1724 = vpack.c.b16 %v1708, %v1708
      %v1725 = vpack.c.b16 %v1709, %v1709
      %v1726 = vpack.c.b16 %v1710, %v1710
      %v1727 = vpack.c.b16 %v1711, %v1711
      %v1728 = vunpack.c.l.b16 %v1712
      %v1729 = vunpack.c.l.b16 %v1713
      %v1730 = vunpack.c.l.b16 %v1714
      %v1731 = vunpack.c.l.b16 %v1715
      %v1732 = vunpack.c.l.b16 %v1716
      %v1733 = vunpack.c.l.b16 %v1717
      %v1734 = vunpack.c.l.b16 %v1718
      %v1735 = vunpack.c.l.b16 %v1719
      %v1736 = vunpack.c.l.b16 %v1720
      %v1737 = vunpack.c.l.b16 %v1721
      %v1738 = vunpack.c.l.b16 %v1722
      %v1739 = vunpack.c.l.b16 %v1723
      %v1740 = vunpack.c.l.b16 %v1724
      %v1741 = vunpack.c.l.b16 %v1725
      %v1742 = vunpack.c.l.b16 %v1726
      %v1743 = vunpack.c.l.b16 %v1727
      %v1744 = vsel %vm1062, %v1729, %v1728
      %v1745 = vsel %vm1064, %v1730, %v1744
      %v1746 = vsel %vm1066, %v1731, %v1745
      %v1747 = vsel %vm1068, %v1732, %v1746
      %v1748 = vsel %vm1070, %v1733, %v1747
      %v1749 = vsel %vm1072, %v1734, %v1748
      %v1750 = vsel %vm1074, %v1735, %v1749
      %v1751 = vsel %vm1062, %v1737, %v1736
      %v1752 = vsel %vm1064, %v1738, %v1751
      %v1753 = vsel %vm1066, %v1739, %v1752
      %v1754 = vsel %vm1068, %v1740, %v1753
      %v1755 = vsel %vm1070, %v1741, %v1754
      %v1756 = vsel %vm1072, %v1742, %v1755
      %v1757 = vsel %vm1074, %v1743, %v1756
      %v1758 = vpack.c.b16 %v1750, %v1750
      %v1759 = vpack.c.b16 %v1757, %v1757
      %1762 = vst [vmem:[%s275] sm:$0xf] %v1758
      %1763 = vst [vmem:[%s275 + $0x4] sm:$0xf] %v1759
      %s1764 = smul.u32 2, %s17
      %p1765 = scmp.lt.s32.totalorder %s1764, 3
      %s1766 = scalar_select %p1765, %s1764, 3
      %s1767 = smul.addr %s1766, 4
      %s1768 = scalar_lea.vmem %s6, %s1767
      // Predicated region
      $region45: #{model_forward.2} parent=43 // pred_check
        %p1769 = pneg %p171
      $region46: #{model_forward.2} parent=43 // pred_check_branch
        %1771 = sbr.rel (%p1769) target = $region48
      $region47: #{model_forward.2} parent=43 // pred_region
        %s1772 = smul.u32 2, %s17
      $region48: #{model_forward.2} parent=43 // pred_fallthru
        _
    $region44: #{model_forward.2} parent=5 // pred_fallthru
      _
    %p1773 = scmp.le.s32.totalorder 2, %s12
    // Predicated region
    $region49: #{model_forward.2} parent=5 // pred_check
      %p1774 = pneg %p1773
    $region50: #{model_forward.2} parent=5 // pred_check_branch
      %1776 = sbr.rel (%p1774) target = $region52
    $region51: #{model_forward.2} parent=5 // pred_region
      %s1777 = ssub.s32 %s12, 2
      // Predicated region
      $region53: #{model_forward.2} parent=51 // pred_check
        %p1778 = pneg %p177
      $region54: #{model_forward.2} parent=51 // pred_check_branch
        %1780 = sbr.rel (%p1778) target = $region56
      $region55: #{model_forward.2} parent=51 // pred_region
        %s1781 = smul.u32 2, %s18
        %p1782 = scmp.lt.s32.totalorder %s1781, 3
        %s1783 = scalar_select %p1782, %s1781, 3
        %s1784 = smul.addr %s1783, 4
        %s1785 = scalar_lea.vmem %s6, %s1784
      $region56: #{model_forward.2} parent=51 // pred_fallthru
        _
    $region52: #{model_forward.2} parent=5 // pred_fallthru
      _
  $region6: #{model_forward.2} parent=0 // loop_footer
    %s16 = sadd.s32 1, %s12
  $region7: #{model_forward.2} parent=0 // loop_footer_branch
    %11 = sbr.rel target = $region3
  $region8: #{model_forward.2} parent=0 // loop_exit
    _

</llo_original>
